<compile_context>
chip_gen: v7x
topology: tpu7x:2x2x1
jax: 0.10.0
libtpu: 0.0.40
codegen_flags: <defaults>
</compile_context>

<pallas_src>
import functools

import jax
import jax.numpy as jnp
import numpy as np
from jax import lax
from jax.experimental import pallas as pl
from jax.experimental.pallas import tpu as pltpu

_NEG_BIG = -1e30  # finite "-inf" for padded class columns (avoids 0*inf NaN)


def _pl_kernel(mask_ref, x_ref, wt_ref, b_ref,
               loss_ref, gt_ref, dw_ref, db_ref,
               *, threshold, inv_batch, num_classes):
    """One batch tile: fused forward logits + PL loss + analytic grads.

    Per grid step:
      mask_ref : [TB, 1]     f32
      x_ref    : [TB, F]     bf16  (pipelined)
      wt_ref   : [F, C_pad]  bf16  (resident)
      b_ref    : [1, C_pad]  f32   (padded classes hold -1e30)
      loss_ref : [1, 1]      f32   SMEM accumulator
      gt_ref   : [TB, 1]     f32
      dw_ref   : [C_pad, F]  f32   resident VMEM accumulator
      db_ref   : [1, C_pad]  f32   resident VMEM accumulator
    """
    step = pl.program_id(0)

    @pl.when(step == 0)
    def _init():
        loss_ref[0, 0] = jnp.float32(0.0)
        dw_ref[...] = jnp.zeros_like(dw_ref)
        db_ref[...] = jnp.zeros_like(db_ref)

    x_bf = x_ref[...]                               # [TB, F]  bf16
    mask = mask_ref[...]                            # [TB, 1]  f32

    # ---- fused forward: y = x @ W.T + b  (bf16 MXU, f32 accumulate) ----
    y = jnp.dot(x_bf, wt_ref[...],
                preferred_element_type=jnp.float32) + b_ref[...]   # [TB, C_pad]
    tb, c_pad = y.shape

    # ---- softmax / log_softmax over class axis (lane axis) ----
    m = jnp.max(y, axis=1, keepdims=True)
    z = y - m                                       # row max is exactly 0.0
    ez = jnp.exp(z)                                 # padded cols -> exactly 0.0
    sez = jnp.sum(ez, axis=1, keepdims=True)
    probs = ez / sez
    logsm = z - jnp.log(sez)

    # ---- one-hot of argmax (first max; tie-break on logits, not probs) ----
    col = lax.broadcasted_iota(jnp.int32, (tb, c_pad), 1)
    first_max = jnp.min(jnp.where(z == 0.0, col, c_pad), axis=1, keepdims=True)
    onehot = (col == first_max).astype(jnp.float32)

    # ---- confidence masks and (detached) target ----
    gt = jnp.max((probs > threshold).astype(jnp.float32), axis=1, keepdims=True)
    lt = 1.0 - gt
    p_target = gt * jnp.float32(num_classes) * onehot + lt * probs

    # ---- masked mean loss, accumulated across batch tiles ----
    per_sample = -jnp.sum(p_target * logsm, axis=1, keepdims=True)   # [TB, 1]
    loss_ref[0, 0] += jnp.sum(per_sample * mask) * inv_batch
    gt_ref[...] = gt

    # ---- analytic dL/dy (p_target is detached by construction) ----
    s = jnp.sum(p_target, axis=1, keepdims=True)
    dy = (mask * inv_batch) * (probs * s - p_target)                 # [TB, C_pad]

    # ---- parameter grads of the linear model (bf16 MXU, f32 accumulation) ----
    dy_t = jnp.transpose(dy).astype(jnp.bfloat16)                    # [C_pad, TB]
    dw_ref[...] += jnp.dot(dy_t, x_bf, preferred_element_type=jnp.float32)
    ones_row = jnp.ones((1, tb), dtype=jnp.bfloat16)
    db_ref[...] += jnp.dot(ones_row, dy.astype(jnp.bfloat16),
                           preferred_element_type=jnp.float32)


def pl_forward(x, W, b, mask, *, threshold, num_classes, block_b=128):
    """Returns (unlabeled_loss, gt_mask, unlabeled_grads) like PL.forward.

    The synthetic model is nn.Linear(F, num_classes); its forward is fused
    into the kernel and its gradients (weight, bias) are returned flattened
    in named_parameters() order.
    """
    B = x.shape[0]
    x_flat = x.reshape(B, -1)
    F = x_flat.shape[1]
    assert W.shape == (num_classes, F)

    c_pad = max(128, ((num_classes + 127) // 128) * 128)   # full lane width
    tb = block_b
    b_rows = ((B + tb - 1) // tb) * tb                     # pad batch to tiles

    x_bf = x_flat.astype(jnp.bfloat16)
    mask2 = mask.astype(jnp.float32).reshape(B, 1)
    if b_rows != B:
        x_bf = jnp.pad(x_bf, ((0, b_rows - B), (0, 0)))
        mask2 = jnp.pad(mask2, ((0, b_rows - B), (0, 0)))  # mask=0 -> no loss/grad

    # W^T padded to [F, C_pad] (zero columns); bias padded with -1e30.
    wt = jnp.zeros((F, c_pad), jnp.bfloat16).at[:, :num_classes].set(
        W.astype(jnp.bfloat16).T)
    b_vec = jnp.full((1, c_pad), _NEG_BIG, jnp.float32).at[0, :num_classes].set(
        b.astype(jnp.float32))

    kernel = functools.partial(_pl_kernel,
                               threshold=float(threshold),
                               inv_batch=1.0 / float(B),
                               num_classes=num_classes)

    grid = (b_rows // tb,)
    grid_spec = pltpu.PrefetchScalarGridSpec(
        num_scalar_prefetch=0,
        grid=grid,
        in_specs=[
            pl.BlockSpec((tb, 1), lambda i: (i, 0)),         # mask tile
            pl.BlockSpec((tb, F), lambda i: (i, 0)),         # x tile (pipelined)
            pl.BlockSpec((F, c_pad), lambda i: (0, 0)),      # W^T (resident)
            pl.BlockSpec((1, c_pad), lambda i: (0, 0)),      # bias (resident)
        ],
        out_specs=(
            pl.BlockSpec((1, 1), lambda i: (0, 0),
                         memory_space=pltpu.MemorySpace.SMEM),  # loss scalar
            pl.BlockSpec((tb, 1), lambda i: (i, 0)),            # gt mask
            pl.BlockSpec((c_pad, F), lambda i: (0, 0)),         # dW accumulator
            pl.BlockSpec((1, c_pad), lambda i: (0, 0)),         # db accumulator
        ),
    )
    out_shapes = (
        jax.ShapeDtypeStruct((1, 1), jnp.float32),
        jax.ShapeDtypeStruct((b_rows, 1), jnp.float32),
        jax.ShapeDtypeStruct((c_pad, F), jnp.float32),
        jax.ShapeDtypeStruct((1, c_pad), jnp.float32),
    )

    loss, gt, dW, db = pl.pallas_call(
        kernel,
        out_shape=out_shapes,
        grid_spec=grid_spec,
        compiler_params=pltpu.CompilerParams(
            dimension_semantics=("arbitrary",),   # batch axis carries accumulators
            vmem_limit_bytes=32 * 1024 * 1024),   # fits v5e/v6e/v7x scoped VMEM
    )(mask2, x_bf, wt, b_vec)

    grads = jnp.concatenate([dW[:num_classes, :].reshape(-1),
                             db[0, :num_classes]])
    return loss[0, 0], gt[:B, 0], grads


def _reference(x, W, b, mask, *, threshold, num_classes):
    """Pure-JAX reference with the same bf16 casting as the kernel."""
    B = x.shape[0]
    x_bf = x.reshape(B, -1).astype(jnp.bfloat16)
    W_bf = W.astype(jnp.bfloat16)

    y = jnp.dot(x_bf, W_bf.T, preferred_element_type=jnp.float32) + b
    m = jnp.max(y, axis=1, keepdims=True)
    z = y - m
    ez = jnp.exp(z)
    sez = jnp.sum(ez, axis=1, keepdims=True)
    probs = ez / sez
    logsm = z - jnp.log(sez)

    onehot = jax.nn.one_hot(jnp.argmax(y, axis=1), num_classes,
                            dtype=jnp.float32)
    gt = jnp.max((probs > threshold).astype(jnp.float32), axis=1)
    lt = 1.0 - gt
    p_target = gt[:, None] * num_classes * onehot + lt[:, None] * probs

    loss = jnp.mean(-jnp.sum(p_target * logsm, axis=1) * mask)

    s = jnp.sum(p_target, axis=1, keepdims=True)
    dy = (mask[:, None] * (1.0 / B)) * (probs * s - p_target)
    dy_bf = dy.astype(jnp.bfloat16)
    dW = jnp.dot(dy_bf.T, x_bf, preferred_element_type=jnp.float32)
    db = jnp.sum(dy_bf.astype(jnp.float32), axis=0)
    grads = jnp.concatenate([dW.reshape(-1), db])
    return loss, gt, grads


if __name__ == "__main__":
    # batch=256 so the kernel runs a 2-step pipelined grid (TB=128); still tiny.
    B, C_in, H, Wd = 256, 4, 8, 8            # x: [256, 4, 8, 8] -> F = 256
    num_classes = 16
    threshold = 0.25

    key = jax.random.PRNGKey(0)
    kx, kw, kb, km = jax.random.split(key, 4)
    x = jax.random.normal(kx, (B, C_in, H, Wd), dtype=jnp.float32)
    F_dim = C_in * H * Wd
    # deterministic synthetic "model" parameters (nn.Linear(F, num_classes))
    W = 0.05 * jax.random.normal(kw, (num_classes, F_dim), dtype=jnp.float32)
    bparam = 0.01 * jax.random.normal(kb, (num_classes,), dtype=jnp.float32)
    mask = jax.random.bernoulli(km, 0.7, (B,)).astype(jnp.float32)

    loss, gt_mask, grads = pl_forward(
        x, W, bparam, mask, threshold=threshold, num_classes=num_classes,
        block_b=128)
    jax.block_until_ready((loss, gt_mask, grads))

    ref_loss, ref_gt, ref_grads = _reference(
        x, W, bparam, mask, threshold=threshold, num_classes=num_classes)

    np.testing.assert_allclose(np.asarray(loss), np.asarray(ref_loss),
                               rtol=1e-4, atol=1e-5)
    np.testing.assert_allclose(np.asarray(gt_mask), np.asarray(ref_gt),
                               rtol=0, atol=0)
    np.testing.assert_allclose(np.asarray(grads), np.asarray(ref_grads),
                               rtol=1e-2, atol=2e-3)

    print("KERNEL_OK")
</pallas_src>

<mosaic_0001>
module attributes {stable_mosaic.version = 11 : i64} {
  func.func @_pl_kernel(%arg0: i32, %arg1: memref<128x1xf32, #tpu.memory_space<vmem>>, %arg2: memref<128x256xbf16, #tpu.memory_space<vmem>>, %arg3: memref<256x128xbf16, #tpu.memory_space<vmem>>, %arg4: memref<1x128xf32, #tpu.memory_space<vmem>>, %arg5: memref<1x1xf32, #tpu.memory_space<smem>>, %arg6: memref<128x1xf32, #tpu.memory_space<vmem>>, %arg7: memref<128x256xf32, #tpu.memory_space<vmem>>, %arg8: memref<1x128xf32, #tpu.memory_space<vmem>>) attributes {dimension_semantics = [#tpu.dimension_semantics<arbitrary>], iteration_bounds = array<i64: 2>, scalar_prefetch = 0 : i64, scratch_operands = 0 : i64, tpu.core_type = #tpu.core_type<tc>, window_params = [{transform_indices = @transform_0, window_bounds = array<i64: 128, 1>}, {transform_indices = @transform_1, window_bounds = array<i64: 128, 256>}, {pipeline_mode = #tpu.pipeline_mode<synchronous>, transform_indices = @transform_2, window_bounds = array<i64: 256, 128>}, {pipeline_mode = #tpu.pipeline_mode<synchronous>, transform_indices = @transform_3, window_bounds = array<i64: 1, 128>}, {transform_indices = @transform_4, window_bounds = array<i64: 1, 1>}, {transform_indices = @transform_5, window_bounds = array<i64: 128, 1>}, {pipeline_mode = #tpu.pipeline_mode<synchronous>, transform_indices = @transform_6, window_bounds = array<i64: 128, 256>}, {pipeline_mode = #tpu.pipeline_mode<synchronous>, transform_indices = @transform_7, window_bounds = array<i64: 1, 128>}]} {
    %c0_i32 = arith.constant 0 : i32
    %0 = arith.cmpi eq, %arg0, %c0_i32 : i32
    %1 = arith.extui %0 : i1 to i32
    %c0_i32_0 = arith.constant 0 : i32
    %2 = arith.cmpi ne, %1, %c0_i32_0 : i32
    scf.if %2 {
      %cst_39 = arith.constant 0.000000e+00 : f32
      %c0_40 = arith.constant 0 : index
      %c0_41 = arith.constant 0 : index
      %84 = memref.load %arg5[%c0_40, %c0_41] : memref<1x1xf32, #tpu.memory_space<smem>>
      memref.store %cst_39, %arg5[%c0_40, %c0_41] : memref<1x1xf32, #tpu.memory_space<smem>>
      %cst_42 = arith.constant 0.000000e+00 : f32
      %85 = vector.broadcast %cst_42 : f32 to vector<128x256xf32>
      %c0_43 = arith.constant 0 : index
      %c0_44 = arith.constant 0 : index
      %86 = vector.load %arg7[%c0_43, %c0_44] : memref<128x256xf32, #tpu.memory_space<vmem>>, vector<128x256xf32>
      tpu.vector_store %arg7[%c0_43, %c0_44], %85 {strides = array<i32>} : memref<128x256xf32, #tpu.memory_space<vmem>>, vector<128x256xf32>,
      %cst_45 = arith.constant 0.000000e+00 : f32
      %87 = vector.broadcast %cst_45 : f32 to vector<1x128xf32>
      %c0_46 = arith.constant 0 : index
      %c0_47 = arith.constant 0 : index
      %88 = vector.load %arg8[%c0_46, %c0_47] : memref<1x128xf32, #tpu.memory_space<vmem>>, vector<1x128xf32>
      tpu.vector_store %arg8[%c0_46, %c0_47], %87 {strides = array<i32>} : memref<1x128xf32, #tpu.memory_space<vmem>>, vector<1x128xf32>,
    } else {
    }
    %c0 = arith.constant 0 : index
    %c0_1 = arith.constant 0 : index
    %3 = vector.load %arg2[%c0, %c0_1] : memref<128x256xbf16, #tpu.memory_space<vmem>>, vector<128x256xbf16>
    %c0_2 = arith.constant 0 : index
    %c0_3 = arith.constant 0 : index
    %4 = vector.load %arg1[%c0_2, %c0_3] : memref<128x1xf32, #tpu.memory_space<vmem>>, vector<128x1xf32>
    %c0_4 = arith.constant 0 : index
    %c0_5 = arith.constant 0 : index
    %5 = vector.load %arg3[%c0_4, %c0_5] : memref<256x128xbf16, #tpu.memory_space<vmem>>, vector<256x128xbf16>
    %cst = arith.constant dense<0.000000e+00> : vector<128x128xf32>
    %6 = tpu.matmul %3, %5, %cst {dimension_numbers = #tpu.dot_dimension_numbers<[1], [0], [0], [1], [0, 0, 1, 1], [], []>} : vector<128x256xbf16>, vector<256x128xbf16>, vector<128x128xf32> -> vector<128x128xf32>
    %c0_6 = arith.constant 0 : index
    %c0_7 = arith.constant 0 : index
    %7 = vector.load %arg4[%c0_6, %c0_7] : memref<1x128xf32, #tpu.memory_space<vmem>>, vector<1x128xf32>
    %8 = vector.broadcast %7 : vector<1x128xf32> to vector<128x128xf32>
    %9 = arith.addf %6, %8 : vector<128x128xf32>
    %cst_8 = arith.constant dense<0xFF800000> : vector<128xf32>
    %10 = vector.multi_reduction <maximumf>, %9, %cst_8 [1] : vector<128x128xf32> to vector<128xf32>
    %11 = vector.shape_cast %10 : vector<128xf32> to vector<128x1xf32>
    %12 = vector.broadcast %11 : vector<128x1xf32> to vector<128x128xf32>
    %13 = arith.subf %9, %12 : vector<128x128xf32>
    %14 = math.exp %13 : vector<128x128xf32>
    %cst_9 = arith.constant dense<0.000000e+00> : vector<128xf32>
    %15 = vector.multi_reduction <add>, %14, %cst_9 [1] : vector<128x128xf32> to vector<128xf32>
    %16 = vector.shape_cast %15 : vector<128xf32> to vector<128x1xf32>
    %17 = vector.broadcast %16 : vector<128x1xf32> to vector<128x128xf32>
    %18 = arith.divf %14, %17 : vector<128x128xf32>
    %19 = math.log %16 : vector<128x1xf32>
    %20 = vector.broadcast %19 : vector<128x1xf32> to vector<128x128xf32>
    %21 = arith.subf %13, %20 : vector<128x128xf32>
    %22 = tpu.iota {dimensions = array<i32: 1>} : vector<128x128xi32>
    %cst_10 = arith.constant 0.000000e+00 : f32
    %23 = vector.broadcast %cst_10 : f32 to vector<128x128xf32>
    %24 = arith.cmpf oeq, %13, %23 : vector<128x128xf32>
    %c128_i32 = arith.constant 128 : i32
    %25 = vector.broadcast %c128_i32 : i32 to vector<128x128xi32>
    %26 = arith.select %24, %22, %25 : vector<128x128xi1>, vector<128x128xi32>
    %cst_11 = arith.constant dense<2147483647> : vector<128xi32>
    %27 = vector.multi_reduction <minsi>, %26, %cst_11 [1] : vector<128x128xi32> to vector<128xi32>
    %28 = vector.shape_cast %27 : vector<128xi32> to vector<128x1xi32>
    %29 = vector.broadcast %28 : vector<128x1xi32> to vector<128x128xi32>
    %30 = arith.cmpi eq, %22, %29 : vector<128x128xi32>
    %31 = arith.extui %30 : vector<128x128xi1> to vector<128x128xi32>
    %32 = arith.sitofp %31 : vector<128x128xi32> to vector<128x128xf32>
    %cst_12 = arith.constant 2.500000e-01 : f32
    %33 = vector.broadcast %cst_12 : f32 to vector<128x128xf32>
    %34 = arith.cmpf ogt, %18, %33 : vector<128x128xf32>
    %35 = arith.extui %34 : vector<128x128xi1> to vector<128x128xi32>
    %36 = arith.sitofp %35 : vector<128x128xi32> to vector<128x128xf32>
    %cst_13 = arith.constant dense<0xFF800000> : vector<128xf32>
    %37 = vector.multi_reduction <maximumf>, %36, %cst_13 [1] : vector<128x128xf32> to vector<128xf32>
    %38 = vector.shape_cast %37 : vector<128xf32> to vector<128x1xf32>
    %cst_14 = arith.constant 1.000000e+00 : f32
    %39 = vector.broadcast %cst_14 : f32 to vector<128x1xf32>
    %40 = arith.subf %39, %38 : vector<128x1xf32>
    %cst_15 = arith.constant 1.600000e+01 : f32
    %41 = vector.broadcast %cst_15 : f32 to vector<128x1xf32>
    %42 = arith.mulf %38, %41 : vector<128x1xf32>
    %43 = vector.broadcast %42 : vector<128x1xf32> to vector<128x128xf32>
    %44 = arith.mulf %43, %32 : vector<128x128xf32>
    %45 = vector.broadcast %40 : vector<128x1xf32> to vector<128x128xf32>
    %46 = arith.mulf %45, %18 : vector<128x128xf32>
    %47 = arith.addf %44, %46 : vector<128x128xf32>
    %48 = arith.mulf %47, %21 : vector<128x128xf32>
    %cst_16 = arith.constant dense<0.000000e+00> : vector<128xf32>
    %49 = vector.multi_reduction <add>, %48, %cst_16 [1] : vector<128x128xf32> to vector<128xf32>
    %50 = vector.shape_cast %49 : vector<128xf32> to vector<128x1xf32>
    %cst_17 = arith.constant 0.000000e+00 : f32
    %51 = vector.broadcast %cst_17 : f32 to vector<128x1xf32>
    %52 = arith.subf %51, %50 : vector<128x1xf32>
    %c0_18 = arith.constant 0 : index
    %c0_19 = arith.constant 0 : index
    %53 = memref.load %arg5[%c0_18, %c0_19] : memref<1x1xf32, #tpu.memory_space<smem>>
    %54 = arith.mulf %52, %4 : vector<128x1xf32>
    %55 = vector.shape_cast %54 : vector<128x1xf32> to vector<1x128x1xf32>
    %cst_20 = arith.constant dense<0.000000e+00> : vector<1xf32>
    %56 = vector.multi_reduction <add>, %55, %cst_20 [1, 2] : vector<1x128x1xf32> to vector<1xf32>
    %57 = vector.shape_cast %56 : vector<1xf32> to vector<1x1x1xf32>
    %58 = vector.extract %57[0, 0, 0] : f32 from vector<1x1x1xf32>
    %cst_21 = arith.constant 3.906250e-03 : f32
    %59 = arith.mulf %58, %cst_21 : f32
    %60 = arith.addf %53, %59 : f32
    %c0_22 = arith.constant 0 : index
    %c0_23 = arith.constant 0 : index
    %61 = memref.load %arg5[%c0_22, %c0_23] : memref<1x1xf32, #tpu.memory_space<smem>>
    memref.store %60, %arg5[%c0_22, %c0_23] : memref<1x1xf32, #tpu.memory_space<smem>>
    %c0_24 = arith.constant 0 : index
    %c0_25 = arith.constant 0 : index
    %62 = vector.load %arg6[%c0_24, %c0_25] : memref<128x1xf32, #tpu.memory_space<vmem>>, vector<128x1xf32>
    tpu.vector_store %arg6[%c0_24, %c0_25], %38 {strides = array<i32>} : memref<128x1xf32, #tpu.memory_space<vmem>>, vector<128x1xf32>,
    %cst_26 = arith.constant dense<0.000000e+00> : vector<128xf32>
    %63 = vector.multi_reduction <add>, %47, %cst_26 [1] : vector<128x128xf32> to vector<128xf32>
    %64 = vector.shape_cast %63 : vector<128xf32> to vector<128x1xf32>
    %cst_27 = arith.constant 3.906250e-03 : f32
    %65 = vector.broadcast %cst_27 : f32 to vector<128x1xf32>
    %66 = arith.mulf %4, %65 : vector<128x1xf32>
    %67 = vector.broadcast %64 : vector<128x1xf32> to vector<128x128xf32>
    %68 = arith.mulf %18, %67 : vector<128x128xf32>
    %69 = arith.subf %68, %47 : vector<128x128xf32>
    %70 = vector.broadcast %66 : vector<128x1xf32> to vector<128x128xf32>
    %71 = arith.mulf %70, %69 : vector<128x128xf32>
    %72 = tpu.transpose %71, [1, 0] : vector<128x128xf32> -> vector<128x128xf32>
    %73 = arith.truncf %72 : vector<128x128xf32> to vector<128x128xbf16>
    %c0_28 = arith.constant 0 : index
    %c0_29 = arith.constant 0 : index
    %74 = vector.load %arg7[%c0_28, %c0_29] : memref<128x256xf32, #tpu.memory_space<vmem>>, vector<128x256xf32>
    %cst_30 = arith.constant dense<0.000000e+00> : vector<128x256xf32>
    %75 = tpu.matmul %73, %3, %cst_30 {dimension_numbers = #tpu.dot_dimension_numbers<[1], [0], [0], [1], [0, 0, 1, 1], [], []>} : vector<128x128xbf16>, vector<128x256xbf16>, vector<128x256xf32> -> vector<128x256xf32>
    %76 = arith.addf %74, %75 : vector<128x256xf32>
    %c0_31 = arith.constant 0 : index
    %c0_32 = arith.constant 0 : index
    %77 = vector.load %arg7[%c0_31, %c0_32] : memref<128x256xf32, #tpu.memory_space<vmem>>, vector<128x256xf32>
    tpu.vector_store %arg7[%c0_31, %c0_32], %76 {strides = array<i32>} : memref<128x256xf32, #tpu.memory_space<vmem>>, vector<128x256xf32>,
    %cst_33 = arith.constant 1.000000e+00 : bf16
    %78 = vector.broadcast %cst_33 : bf16 to vector<1x128xbf16>
    %c0_34 = arith.constant 0 : index
    %c0_35 = arith.constant 0 : index
    %79 = vector.load %arg8[%c0_34, %c0_35] : memref<1x128xf32, #tpu.memory_space<vmem>>, vector<1x128xf32>
    %80 = arith.truncf %71 : vector<128x128xf32> to vector<128x128xbf16>
    %cst_36 = arith.constant dense<0.000000e+00> : vector<1x128xf32>
    %81 = tpu.matmul %78, %80, %cst_36 {dimension_numbers = #tpu.dot_dimension_numbers<[1], [0], [0], [1], [0, 0, 1, 1], [], []>} : vector<1x128xbf16>, vector<128x128xbf16>, vector<1x128xf32> -> vector<1x128xf32>
    %82 = arith.addf %79, %81 : vector<1x128xf32>
    %c0_37 = arith.constant 0 : index
    %c0_38 = arith.constant 0 : index
    %83 = vector.load %arg8[%c0_37, %c0_38] : memref<1x128xf32, #tpu.memory_space<vmem>>, vector<1x128xf32>
    tpu.vector_store %arg8[%c0_37, %c0_38], %82 {strides = array<i32>} : memref<1x128xf32, #tpu.memory_space<vmem>>, vector<1x128xf32>,
    return
  }
  func.func @transform_0(%arg0: i32) -> (i32, i32) {
    %c0_i32 = arith.constant 0 : i32
    %c0_i32_0 = arith.constant 0 : i32
    return %arg0, %c0_i32 : i32, i32
  }
  func.func @transform_1(%arg0: i32) -> (i32, i32) {
    %c0_i32 = arith.constant 0 : i32
    %c0_i32_0 = arith.constant 0 : i32
    return %arg0, %c0_i32 : i32, i32
  }
  func.func @transform_2(%arg0: i32) -> (i32, i32) {
    %c0_i32 = arith.constant 0 : i32
    %c0_i32_0 = arith.constant 0 : i32
    %c0_i32_1 = arith.constant 0 : i32
    return %c0_i32, %c0_i32_0 : i32, i32
  }
  func.func @transform_3(%arg0: i32) -> (i32, i32) {
    %c0_i32 = arith.constant 0 : i32
    %c0_i32_0 = arith.constant 0 : i32
    %c0_i32_1 = arith.constant 0 : i32
    return %c0_i32, %c0_i32_0 : i32, i32
  }
  func.func @transform_4(%arg0: i32) -> (i32, i32) {
    %c0_i32 = arith.constant 0 : i32
    %c0_i32_0 = arith.constant 0 : i32
    %c0_i32_1 = arith.constant 0 : i32
    return %c0_i32, %c0_i32_0 : i32, i32
  }
  func.func @transform_5(%arg0: i32) -> (i32, i32) {
    %c0_i32 = arith.constant 0 : i32
    %c0_i32_0 = arith.constant 0 : i32
    return %arg0, %c0_i32 : i32, i32
  }
  func.func @transform_6(%arg0: i32) -> (i32, i32) {
    %c0_i32 = arith.constant 0 : i32
    %c0_i32_0 = arith.constant 0 : i32
    %c0_i32_1 = arith.constant 0 : i32
    return %c0_i32, %c0_i32_0 : i32, i32
  }
  func.func @transform_7(%arg0: i32) -> (i32, i32) {
    %c0_i32 = arith.constant 0 : i32
    %c0_i32_0 = arith.constant 0 : i32
    %c0_i32_1 = arith.constant 0 : i32
    return %c0_i32, %c0_i32_0 : i32, i32
  }
}

</mosaic_0001>

<llo_original>
// kernel: tpu_custom_call.1
$region0: #{tpu_custom_call.1}
  #allocation0 [shape = 'u32[]', space=smem, size = 0x4, offset = 0x4, fixed_abs, tag = 'smem constant byte address 0x4 - core index']
  #allocation1 [shape = 'u32[144,128]{1,0:T(1,128)}', space=vmem, size = 0x12000, scoped, tag = 'internal scratch']
  %s0 = inlined_call_operand.vmem [shape: f32[256,1], index: 0, kind: input, shape index: {}]
  %s1 = inlined_call_operand.vmem [shape: bf16[256,256], index: 1, kind: input, shape index: {}]
  %s2 = inlined_call_operand.hbm [shape: bf16[256,128], index: 2, kind: input, shape index: {}]
  %s3 = inlined_call_operand.vmem [shape: f32[1,128], index: 3, kind: input, shape index: {}]
  %s4 = inlined_call_operand.hbm [shape: f32[1,1], index: 4, kind: output, shape index: {0}]
  %s5 = inlined_call_operand.vmem [shape: f32[256,1], index: 5, kind: output, shape index: {1}]
  %s6 = inlined_call_operand.hbm [shape: f32[128,256], index: 6, kind: output, shape index: {2}]
  %s7 = inlined_call_operand.hbm [shape: f32[1,128], index: 7, kind: output, shape index: {3}]
  %8 = xla_tuple %s4, %s5, %s6, %s7
  %s9 = sld [smem:[#allocation0]]
  $region81: #{tpu_custom_call.1} parent=0
    _
  %s11 = ssub.s32 1, %s9
  %s12 = scalar_select 0, %s11, %s9
  $region1: #{tpu_custom_call.1} parent=0
    #allocation2 [shape = 'u8[65536]{0}', space=vmem, size = 0x10000, scoped, tag = 'input window, operand 2, single buffered']
    #allocation3 [shape = 's32[2]{0}', space=sflag, size = 0x8, scoped, tag = 'scoped memory for tpu_custom_call.1']
    #allocation4 [shape = 's32[2]{0}', space=sflag, size = 0x8, scoped, tag = 'scoped memory for tpu_custom_call.1']
    #allocation5 [shape = 's32[2]{0}', space=sflag, size = 0x8, scoped, tag = 'scoped memory for tpu_custom_call.1']
    #allocation6 [shape = 'u8[512]{0}', space=smem, size = 0x200, scoped, tag = 'output window, operand 0, single buffered']
    #allocation7 [shape = 'u8[131072]{0}', space=vmem, size = 0x20000, scoped, tag = 'output window, operand 2, single buffered']
    #allocation8 [shape = 'u8[512]{0}', space=vmem, size = 0x400, scoped, tag = 'output window, operand 3, single buffered']
    #allocation9 [shape = 's32[1]{0}', space=sflag, size = 0x4, scoped, tag = 'scoped memory for tpu_custom_call.1']
    %13 = vsyncpa [#allocation3], 0
    %14 = vsyncpa [#allocation5], 0
    %15 = vsyncpa [#allocation4], 0
    %16 = vsyncpa [#allocation9], 0
    loop: start=0, step=1, limit=4
    $region2: #{tpu_custom_call.1} parent=1 // loop_pre_header
      _
    $region3: #{tpu_custom_call.1} parent=1 // loop_header
      %s18 = sphi 0, %s22
      %p19 = scmp.ge.s32.totalorder %s18, 4
      %s28 = sphi 0, %s30
      %s31 = sphi 0, %s28
      %s32 = sphi 0, %s31
      %s48 = sphi 0, %s32
      %s54 = sphi 0, %s56
      %s57 = sphi 0, %s54
      %s58 = sphi 0, %s57
      %s74 = sphi 0, %s58
      %s78 = sphi 0, %s78
      %s80 = sphi 0, %s78
      %s81 = sphi 0, %s80
      %s95 = sphi 0, %s81
      %s99 = sphi 0, %s99
      %s101 = sphi 0, %s99
      %s102 = sphi 0, %s101
      %s116 = sphi 0, %s102
      %s120 = sphi 0, %s120
      %s122 = sphi 0, %s120
      %s123 = sphi 0, %s122
      %s137 = sphi 0, %s123
      %s143 = sphi 0, %s145
      %s146 = sphi 0, %s143
      %s147 = sphi 0, %s146
      %s163 = sphi 0, %s147
      %s167 = sphi 0, %s167
      %s169 = sphi 0, %s167
      %s170 = sphi 0, %s169
      %s184 = sphi 0, %s170
      %s188 = sphi 0, %s188
      %s190 = sphi 0, %s188
      %s191 = sphi 0, %s190
      %s205 = sphi 0, %s191
    $region4: #{tpu_custom_call.1} parent=1 // loop_header_branch
      %21 = sbr.rel (%p19) target = $region8
    $region5: #{tpu_custom_call.1} parent=1 // loop_body
      %s23 = ssub.s32 %s18, 1
      %s24 = ssub.s32 %s18, 2
      %s25 = sadd.s32 %s18, 1
      %s26 = ssub.s32 %s18, %s25
      %p27 = scmp.eq.s32.totalorder %s26, 0
      %s29 = sadd.s32 %s28, 1
      %s30 = scalar_select %p27, %s28, %s29
      %p33 = pneg %p27
      %p34 = scmp.eq.s32.totalorder %s18, 1
      %p35 = por %p33, %p34
      %p36 = scmp.ne.s32.totalorder %s28, %s31
      %p37 = scmp.eq.s32.totalorder %s18, 0
      %p38 = por %p36, %p37
      %p39 = scmp.ne.s32.totalorder %s28, %s31
      %p40 = scmp.eq.s32.totalorder %s23, 1
      %p41 = por %p39, %p40
      %p42 = scmp.ne.s32.totalorder %s31, %s32
      %p43 = scmp.eq.s32.totalorder %s23, 0
      %p44 = por %p42, %p43
      %p45 = scmp.ne.s32.totalorder %s31, %s32
      %p46 = scmp.eq.s32.totalorder %s24, 1
      %p47 = por %p45, %p46
      %p49 = scmp.ne.s32.totalorder %s32, %s48
      %p50 = scmp.eq.s32.totalorder %s24, 0
      %p51 = por %p49, %p50
      %s52 = ssub.s32 %s18, %s25
      %p53 = scmp.eq.s32.totalorder %s52, 0
      %s55 = sadd.s32 %s54, 1
      %s56 = scalar_select %p53, %s54, %s55
      %p59 = pneg %p53
      %p60 = scmp.eq.s32.totalorder %s18, 1
      %p61 = por %p59, %p60
      %p62 = scmp.ne.s32.totalorder %s54, %s57
      %p63 = scmp.eq.s32.totalorder %s18, 0
      %p64 = por %p62, %p63
      %p65 = scmp.ne.s32.totalorder %s54, %s57
      %p66 = scmp.eq.s32.totalorder %s23, 1
      %p67 = por %p65, %p66
      %p68 = scmp.ne.s32.totalorder %s57, %s58
      %p69 = scmp.eq.s32.totalorder %s23, 0
      %p70 = por %p68, %p69
      %p71 = scmp.ne.s32.totalorder %s57, %s58
      %p72 = scmp.eq.s32.totalorder %s24, 1
      %p73 = por %p71, %p72
      %p75 = scmp.ne.s32.totalorder %s58, %s74
      %p76 = scmp.eq.s32.totalorder %s24, 0
      %p77 = por %p75, %p76
      %s79 = sadd.s32 %s78, 1
      %p82 = scmp.eq.s32.totalorder %s18, 1
      %p83 = scmp.ne.s32.totalorder %s78, %s80
      %p84 = scmp.eq.s32.totalorder %s18, 0
      %p85 = por %p83, %p84
      %p86 = scmp.ne.s32.totalorder %s78, %s80
      %p87 = scmp.eq.s32.totalorder %s23, 1
      %p88 = por %p86, %p87
      %p89 = scmp.ne.s32.totalorder %s80, %s81
      %p90 = scmp.eq.s32.totalorder %s23, 0
      %p91 = por %p89, %p90
      %p92 = scmp.ne.s32.totalorder %s80, %s81
      %p93 = scmp.eq.s32.totalorder %s24, 1
      %p94 = por %p92, %p93
      %p96 = scmp.ne.s32.totalorder %s81, %s95
      %p97 = scmp.eq.s32.totalorder %s24, 0
      %p98 = por %p96, %p97
      %s100 = sadd.s32 %s99, 1
      %p103 = scmp.eq.s32.totalorder %s18, 1
      %p104 = scmp.ne.s32.totalorder %s99, %s101
      %p105 = scmp.eq.s32.totalorder %s18, 0
      %p106 = por %p104, %p105
      %p107 = scmp.ne.s32.totalorder %s99, %s101
      %p108 = scmp.eq.s32.totalorder %s23, 1
      %p109 = por %p107, %p108
      %p110 = scmp.ne.s32.totalorder %s101, %s102
      %p111 = scmp.eq.s32.totalorder %s23, 0
      %p112 = por %p110, %p111
      %p113 = scmp.ne.s32.totalorder %s101, %s102
      %p114 = scmp.eq.s32.totalorder %s24, 1
      %p115 = por %p113, %p114
      %p117 = scmp.ne.s32.totalorder %s102, %s116
      %p118 = scmp.eq.s32.totalorder %s24, 0
      %p119 = por %p117, %p118
      %s121 = sadd.s32 %s120, 1
      %p124 = scmp.eq.s32.totalorder %s18, 1
      %p125 = scmp.ne.s32.totalorder %s120, %s122
      %p126 = scmp.eq.s32.totalorder %s18, 0
      %p127 = por %p125, %p126
      %p128 = scmp.ne.s32.totalorder %s120, %s122
      %p129 = scmp.eq.s32.totalorder %s23, 1
      %p130 = por %p128, %p129
      %p131 = scmp.ne.s32.totalorder %s122, %s123
      %p132 = scmp.eq.s32.totalorder %s23, 0
      %p133 = por %p131, %p132
      %p134 = scmp.ne.s32.totalorder %s122, %s123
      %p135 = scmp.eq.s32.totalorder %s24, 1
      %p136 = por %p134, %p135
      %p138 = scmp.ne.s32.totalorder %s123, %s137
      %p139 = scmp.eq.s32.totalorder %s24, 0
      %p140 = por %p138, %p139
      %s141 = ssub.s32 %s18, %s25
      %p142 = scmp.eq.s32.totalorder %s141, 0
      %s144 = sadd.s32 %s143, 1
      %s145 = scalar_select %p142, %s143, %s144
      %p148 = pneg %p142
      %p149 = scmp.eq.s32.totalorder %s18, 1
      %p150 = por %p148, %p149
      %p151 = scmp.ne.s32.totalorder %s143, %s146
      %p152 = scmp.eq.s32.totalorder %s18, 0
      %p153 = por %p151, %p152
      %p154 = scmp.ne.s32.totalorder %s143, %s146
      %p155 = scmp.eq.s32.totalorder %s23, 1
      %p156 = por %p154, %p155
      %p157 = scmp.ne.s32.totalorder %s146, %s147
      %p158 = scmp.eq.s32.totalorder %s23, 0
      %p159 = por %p157, %p158
      %p160 = scmp.ne.s32.totalorder %s146, %s147
      %p161 = scmp.eq.s32.totalorder %s24, 1
      %p162 = por %p160, %p161
      %p164 = scmp.ne.s32.totalorder %s147, %s163
      %p165 = scmp.eq.s32.totalorder %s24, 0
      %p166 = por %p164, %p165
      %s168 = sadd.s32 %s167, 1
      %p171 = scmp.eq.s32.totalorder %s18, 1
      %p172 = scmp.ne.s32.totalorder %s167, %s169
      %p173 = scmp.eq.s32.totalorder %s18, 0
      %p174 = por %p172, %p173
      %p175 = scmp.ne.s32.totalorder %s167, %s169
      %p176 = scmp.eq.s32.totalorder %s23, 1
      %p177 = por %p175, %p176
      %p178 = scmp.ne.s32.totalorder %s169, %s170
      %p179 = scmp.eq.s32.totalorder %s23, 0
      %p180 = por %p178, %p179
      %p181 = scmp.ne.s32.totalorder %s169, %s170
      %p182 = scmp.eq.s32.totalorder %s24, 1
      %p183 = por %p181, %p182
      %p185 = scmp.ne.s32.totalorder %s170, %s184
      %p186 = scmp.eq.s32.totalorder %s24, 0
      %p187 = por %p185, %p186
      %s189 = sadd.s32 %s188, 1
      %p192 = scmp.eq.s32.totalorder %s18, 1
      %p193 = scmp.ne.s32.totalorder %s188, %s190
      %p194 = scmp.eq.s32.totalorder %s18, 0
      %p195 = por %p193, %p194
      %p196 = scmp.ne.s32.totalorder %s188, %s190
      %p197 = scmp.eq.s32.totalorder %s23, 1
      %p198 = por %p196, %p197
      %p199 = scmp.ne.s32.totalorder %s190, %s191
      %p200 = scmp.eq.s32.totalorder %s23, 0
      %p201 = por %p199, %p200
      %p202 = scmp.ne.s32.totalorder %s190, %s191
      %p203 = scmp.eq.s32.totalorder %s24, 1
      %p204 = por %p202, %p203
      %p206 = scmp.ne.s32.totalorder %s191, %s205
      %p207 = scmp.eq.s32.totalorder %s24, 0
      %p208 = por %p206, %p207
      %p209 = scmp.le.s32.totalorder 1, %s18
      %p210 = scmp.lt.s32.totalorder %s18, 3
      %p211 = pnand %p209, %p210
      %p212 = pneg %p211
      // Predicated region
      $region9: #{tpu_custom_call.1} parent=5 // pred_check
        _
      $region10: #{tpu_custom_call.1} parent=5 // pred_check_branch
        %214 = sbr.rel (%p211) target = $region12
      $region11: #{tpu_custom_call.1} parent=5 // pred_region
        %s215 = ssub.s32 %s18, 1
        // Predicated region
        $region13: #{tpu_custom_call.1} parent=11 // pred_check
          %p216 = pneg %p91
        $region14: #{tpu_custom_call.1} parent=11 // pred_check_branch
          %218 = sbr.rel (%p216) target = $region16
        $region15: #{tpu_custom_call.1} parent=11 // pred_region
          %s220 = ssub.s32 2048, 2048
          %221 = vsyncadd [#allocation3], %s220
          %s222 = sshll.u32 [#allocation2], 4
          %s223 = int_to_ptr.vmem [resolvable:$true] %s222
          %228 = dma.hbm_to_vmem [thread:$0]  %s2, 2048, %s223, [#allocation3], 64, 64, 4
        $region16: #{tpu_custom_call.1} parent=11 // pred_fallthru
          _
        // Predicated region
        $region17: #{tpu_custom_call.1} parent=11 // pred_check
          %p229 = pneg %p112
        $region18: #{tpu_custom_call.1} parent=11 // pred_check_branch
          %231 = sbr.rel (%p229) target = $region20
        $region19: #{tpu_custom_call.1} parent=11 // pred_region
          _
        $region20: #{tpu_custom_call.1} parent=11 // pred_fallthru
          _
      $region12: #{tpu_custom_call.1} parent=5 // pred_fallthru
        _
      %p232 = scmp.lt.s32.totalorder %s18, 2
      // Predicated region
      $region21: #{tpu_custom_call.1} parent=5 // pred_check
        %p233 = pneg %p232
      $region22: #{tpu_custom_call.1} parent=5 // pred_check_branch
        %235 = sbr.rel (%p233) target = $region24
      $region23: #{tpu_custom_call.1} parent=5 // pred_region
        // Predicated region
        $region25: #{tpu_custom_call.1} parent=23 // pred_check
          %p236 = pneg %p38
        $region26: #{tpu_custom_call.1} parent=23 // pred_check_branch
          %238 = sbr.rel (%p236) target = $region28
        $region27: #{tpu_custom_call.1} parent=23 // pred_region
          %s239 = smul.u32 16, %s18
          %p240 = scmp.lt.s32.totalorder %s239, 31
          %s241 = scalar_select %p240, %s239, 31
          %s242 = smul.addr %s241, 8
          %s243 = scalar_lea.vmem %s0, %s242
          %s244 = smul.u32 16, %s18
        $region28: #{tpu_custom_call.1} parent=23 // pred_fallthru
          _
        // Predicated region
        $region29: #{tpu_custom_call.1} parent=23 // pred_check
          %p245 = pneg %p64
        $region30: #{tpu_custom_call.1} parent=23 // pred_check_branch
          %247 = sbr.rel (%p245) target = $region32
        $region31: #{tpu_custom_call.1} parent=23 // pred_region
          %s248 = smul.u32 16, %s18
          %p249 = scmp.lt.s32.totalorder %s248, 31
          %s250 = scalar_select %p249, %s248, 31
          %s251 = smul.addr %s250, 2
          %s252 = smul.addr %s251, 4
          %s253 = scalar_lea.vmem %s1, %s252
          %s254 = smul.u32 16, %s18
        $region32: #{tpu_custom_call.1} parent=23 // pred_fallthru
          _
      $region24: #{tpu_custom_call.1} parent=5 // pred_fallthru
        _
      %p255 = scmp.le.s32.totalorder 1, %s18
      %p256 = scmp.lt.s32.totalorder %s18, 3
      %p257 = pnand %p255, %p256
      %p258 = pneg %p257
      // Predicated region
      $region33: #{tpu_custom_call.1} parent=5 // pred_check
        _
      $region34: #{tpu_custom_call.1} parent=5 // pred_check_branch
        %260 = sbr.rel (%p257) target = $region36
      $region35: #{tpu_custom_call.1} parent=5 // pred_region
        %s261 = ssub.s32 %s18, 1
        // Predicated region
        $region37: #{tpu_custom_call.1} parent=35 // pred_check
          %p262 = pneg %p91
        $region38: #{tpu_custom_call.1} parent=35 // pred_check_branch
          %264 = sbr.rel (%p262) target = $region40
        $region39: #{tpu_custom_call.1} parent=35 // pred_region
          %265 = dma.done [#allocation3], 2048
        $region40: #{tpu_custom_call.1} parent=35 // pred_fallthru
          _
        %s266 = smul.u32 16, %s23
        %p267 = scmp.lt.s32.totalorder %s266, 31
        %s268 = scalar_select %p267, %s266, 31
        %s269 = smul.addr %s268, 8
        %s270 = scalar_lea.vmem %s0, %s269
        %p271 = pneg %p44
        %p272 = pneg %p41
        %s273 = smul.u32 16, %s23
        %p274 = scmp.lt.s32.totalorder %s273, 31
        %s275 = scalar_select %p274, %s273, 31
        %s276 = smul.addr %s275, 2
        %s277 = smul.addr %s276, 4
        %s278 = scalar_lea.vmem %s1, %s277
        %p279 = pneg %p70
        %p280 = pneg %p67
        %p281 = pneg %p91
        %p282 = pneg %p88
        %p283 = pneg %p112
        %p284 = pneg %p109
        %p285 = pneg %p133
        %p286 = pneg %p130
        %p287 = pneg %p159
        %p288 = pneg %p156
        %s289 = smul.u32 16, %s23
        %p290 = scmp.lt.s32.totalorder %s289, 31
        %s291 = scalar_select %p290, %s289, 31
        %s292 = smul.addr %s291, 8
        %s293 = scalar_lea.vmem %s5, %s292
        %p294 = pneg %p180
        %p295 = pneg %p177
        %p296 = pneg %p201
        %p297 = pneg %p198
        %s298 = smul.u32 16, %s23
        %p299 = scmp.lt.s32.totalorder %s298, 31
        %s300 = scalar_select %p299, %s298, 31
        %s301 = smul.addr %s300, 8
        %s302 = scalar_lea.vmem %s0, %s301
        %s303 = smul.u32 16, %s23
        %s304 = smul.u32 16, %s23
        %p305 = scmp.lt.s32.totalorder %s304, 31
        %s306 = scalar_select %p305, %s304, 31
        %s307 = smul.addr %s306, 2
        %s308 = smul.addr %s307, 4
        %s309 = scalar_lea.vmem %s1, %s308
        %s310 = smul.u32 16, %s23
        %s311 = smul.u32 16, %s23
        %p312 = scmp.lt.s32.totalorder %s311, 31
        %s313 = scalar_select %p312, %s311, 31
        %s314 = smul.addr %s313, 8
        %s315 = scalar_lea.vmem %s5, %s314
        %s316 = smul.u32 16, %s23
        %p319 = scmp.eq.s32.totalorder %s23, 0
        // Predicated region
        $region41: #{tpu_custom_call.1} parent=35 // pred_check
          %p320 = pneg %p319
        $region42: #{tpu_custom_call.1} parent=35 // pred_check_branch
          %322 = sbr.rel (%p320) target = $region44
        $region43: #{tpu_custom_call.1} parent=35 // pred_region
          %s323 = scalar_lea.smem [#allocation6], 0
          %324 = sst [smem:[%s323]] 0.0
          %325 = vst [vmem:[#allocation7] sm:$0xff] 0.0
          %326 = vst [vmem:[#allocation7 + $0x8] sm:$0xff] 0.0
          %327 = vst [vmem:[#allocation7 + $0x10] sm:$0xff] 0.0
          %328 = vst [vmem:[#allocation7 + $0x18] sm:$0xff] 0.0
          %329 = vst [vmem:[#allocation7 + $0x20] sm:$0xff] 0.0
          %330 = vst [vmem:[#allocation7 + $0x28] sm:$0xff] 0.0
          %331 = vst [vmem:[#allocation7 + $0x30] sm:$0xff] 0.0
          %332 = vst [vmem:[#allocation7 + $0x38] sm:$0xff] 0.0
          %333 = vst [vmem:[#allocation7 + $0x40] sm:$0xff] 0.0
          %334 = vst [vmem:[#allocation7 + $0x48] sm:$0xff] 0.0
          %335 = vst [vmem:[#allocation7 + $0x50] sm:$0xff] 0.0
          %336 = vst [vmem:[#allocation7 + $0x58] sm:$0xff] 0.0
          %337 = vst [vmem:[#allocation7 + $0x60] sm:$0xff] 0.0
          %338 = vst [vmem:[#allocation7 + $0x68] sm:$0xff] 0.0
          %339 = vst [vmem:[#allocation7 + $0x70] sm:$0xff] 0.0
          %340 = vst [vmem:[#allocation7 + $0x78] sm:$0xff] 0.0
          %341 = vst [vmem:[#allocation7 + $0x80] sm:$0xff] 0.0
          %342 = vst [vmem:[#allocation7 + $0x88] sm:$0xff] 0.0
          %343 = vst [vmem:[#allocation7 + $0x90] sm:$0xff] 0.0
          %344 = vst [vmem:[#allocation7 + $0x98] sm:$0xff] 0.0
          %345 = vst [vmem:[#allocation7 + $0xa0] sm:$0xff] 0.0
          %346 = vst [vmem:[#allocation7 + $0xa8] sm:$0xff] 0.0
          %347 = vst [vmem:[#allocation7 + $0xb0] sm:$0xff] 0.0
          %348 = vst [vmem:[#allocation7 + $0xb8] sm:$0xff] 0.0
          %349 = vst [vmem:[#allocation7 + $0xc0] sm:$0xff] 0.0
          %350 = vst [vmem:[#allocation7 + $0xc8] sm:$0xff] 0.0
          %351 = vst [vmem:[#allocation7 + $0xd0] sm:$0xff] 0.0
          %352 = vst [vmem:[#allocation7 + $0xd8] sm:$0xff] 0.0
          %353 = vst [vmem:[#allocation7 + $0xe0] sm:$0xff] 0.0
          %354 = vst [vmem:[#allocation7 + $0xe8] sm:$0xff] 0.0
          %355 = vst [vmem:[#allocation7 + $0xf0] sm:$0xff] 0.0
          %356 = vst [vmem:[#allocation7 + $0xf8] sm:$0xff] 0.0
          %357 = vst [vmem:[#allocation8] sm:$0x1] 0.0
        $region44: #{tpu_custom_call.1} parent=35 // pred_fallthru
          _
        %v358 = vld [vmem:[%s309] sm:$0xff]
        %v359 = vld [vmem:[%s309 + $0x8] sm:$0xff]
        %v360 = vld [vmem:[%s309 + $0x10] sm:$0xff]
        %v361 = vld [vmem:[%s309 + $0x18] sm:$0xff]
        %v362 = vld [vmem:[%s309 + $0x20] sm:$0xff]
        %v363 = vld [vmem:[%s309 + $0x28] sm:$0xff]
        %v364 = vld [vmem:[%s309 + $0x30] sm:$0xff]
        %v365 = vld [vmem:[%s309 + $0x38] sm:$0xff]
        %v366 = vld [vmem:[%s309 + $0x40] sm:$0xff]
        %v367 = vld [vmem:[%s309 + $0x48] sm:$0xff]
        %v368 = vld [vmem:[%s309 + $0x50] sm:$0xff]
        %v369 = vld [vmem:[%s309 + $0x58] sm:$0xff]
        %v370 = vld [vmem:[%s309 + $0x60] sm:$0xff]
        %v371 = vld [vmem:[%s309 + $0x68] sm:$0xff]
        %v372 = vld [vmem:[%s309 + $0x70] sm:$0xff]
        %v373 = vld [vmem:[%s309 + $0x78] sm:$0xff]
        %v374 = vld [vmem:[%s302] sm:$0xff]
        %v375 = vld [vmem:[%s302 + $0x8] sm:$0xff]
        %v376 = vld [vmem:[%s302 + $0x10] sm:$0xff]
        %v377 = vld [vmem:[%s302 + $0x18] sm:$0xff]
        %v378 = vld [vmem:[%s302 + $0x20] sm:$0xff]
        %v379 = vld [vmem:[%s302 + $0x28] sm:$0xff]
        %v380 = vld [vmem:[%s302 + $0x30] sm:$0xff]
        %v381 = vld [vmem:[%s302 + $0x38] sm:$0xff]
        %v382 = vld [vmem:[%s302 + $0x40] sm:$0xff]
        %v383 = vld [vmem:[%s302 + $0x48] sm:$0xff]
        %v384 = vld [vmem:[%s302 + $0x50] sm:$0xff]
        %v385 = vld [vmem:[%s302 + $0x58] sm:$0xff]
        %v386 = vld [vmem:[%s302 + $0x60] sm:$0xff]
        %v387 = vld [vmem:[%s302 + $0x68] sm:$0xff]
        %v388 = vld [vmem:[%s302 + $0x70] sm:$0xff]
        %v389 = vld [vmem:[%s302 + $0x78] sm:$0xff]
        %v390 = vld [vmem:[#allocation2] sm:$0xf]
        %v391 = vld [vmem:[#allocation2 + $0x4] sm:$0xf]
        %v392 = vld [vmem:[#allocation2 + $0x8] sm:$0xf]
        %v393 = vld [vmem:[#allocation2 + $0xc] sm:$0xf]
        %v394 = vld [vmem:[#allocation2 + $0x10] sm:$0xf]
        %v395 = vld [vmem:[#allocation2 + $0x14] sm:$0xf]
        %v396 = vld [vmem:[#allocation2 + $0x18] sm:$0xf]
        %v397 = vld [vmem:[#allocation2 + $0x1c] sm:$0xf]
        %v398 = vld [vmem:[#allocation2 + $0x20] sm:$0xf]
        %v399 = vld [vmem:[#allocation2 + $0x24] sm:$0xf]
        %v400 = vld [vmem:[#allocation2 + $0x28] sm:$0xf]
        %v401 = vld [vmem:[#allocation2 + $0x2c] sm:$0xf]
        %v402 = vld [vmem:[#allocation2 + $0x30] sm:$0xf]
        %v403 = vld [vmem:[#allocation2 + $0x34] sm:$0xf]
        %v404 = vld [vmem:[#allocation2 + $0x38] sm:$0xf]
        %v405 = vld [vmem:[#allocation2 + $0x3c] sm:$0xf]
        %v406 = vld [vmem:[#allocation2 + $0x40] sm:$0xf]
        %v407 = vld [vmem:[#allocation2 + $0x44] sm:$0xf]
        %v408 = vld [vmem:[#allocation2 + $0x48] sm:$0xf]
        %v409 = vld [vmem:[#allocation2 + $0x4c] sm:$0xf]
        %v410 = vld [vmem:[#allocation2 + $0x50] sm:$0xf]
        %v411 = vld [vmem:[#allocation2 + $0x54] sm:$0xf]
        %v412 = vld [vmem:[#allocation2 + $0x58] sm:$0xf]
        %v413 = vld [vmem:[#allocation2 + $0x5c] sm:$0xf]
        %v414 = vld [vmem:[#allocation2 + $0x60] sm:$0xf]
        %v415 = vld [vmem:[#allocation2 + $0x64] sm:$0xf]
        %v416 = vld [vmem:[#allocation2 + $0x68] sm:$0xf]
        %v417 = vld [vmem:[#allocation2 + $0x6c] sm:$0xf]
        %v418 = vld [vmem:[#allocation2 + $0x70] sm:$0xf]
        %v419 = vld [vmem:[#allocation2 + $0x74] sm:$0xf]
        %v420 = vld [vmem:[#allocation2 + $0x78] sm:$0xf]
        %v421 = vld [vmem:[#allocation2 + $0x7c] sm:$0xf]
        %v422 = vld [vmem:[%s3] sm:$0x1]
        %v424 = vlaneseq
        %v425 = vshrl.u32 %v424, 7
        %v426 = vsub.s32 0, %v425
        %v427 = vrot.slane %v422, %v426
        %v445 = vunpack.c.l.b16 %v358
        %v446 = vunpack.c.h.b16 %v358
        %v447 = vunpack.c.l.b16 %v359
        %v448 = vunpack.c.h.b16 %v359
        %v449 = vunpack.c.l.b16 %v360
        %v450 = vunpack.c.h.b16 %v360
        %v451 = vunpack.c.l.b16 %v361
        %v452 = vunpack.c.h.b16 %v361
        %v453 = vunpack.c.l.b16 %v362
        %v454 = vunpack.c.h.b16 %v362
        %v455 = vunpack.c.l.b16 %v363
        %v456 = vunpack.c.h.b16 %v363
        %v457 = vunpack.c.l.b16 %v364
        %v458 = vunpack.c.h.b16 %v364
        %v459 = vunpack.c.l.b16 %v365
        %v460 = vunpack.c.h.b16 %v365
        %v461 = vunpack.c.l.b16 %v366
        %v462 = vunpack.c.h.b16 %v366
        %v463 = vunpack.c.l.b16 %v367
        %v464 = vunpack.c.h.b16 %v367
        %v465 = vunpack.c.l.b16 %v368
        %v466 = vunpack.c.h.b16 %v368
        %v467 = vunpack.c.l.b16 %v369
        %v468 = vunpack.c.h.b16 %v369
        %v469 = vunpack.c.l.b16 %v370
        %v470 = vunpack.c.h.b16 %v370
        %v471 = vunpack.c.l.b16 %v371
        %v472 = vunpack.c.h.b16 %v371
        %v473 = vunpack.c.l.b16 %v372
        %v474 = vunpack.c.h.b16 %v372
        %v475 = vunpack.c.l.b16 %v373
        %v476 = vunpack.c.h.b16 %v373
        %v477 = vpack.c.b16 %v447, %v445
        %v478 = vpack.c.b16 %v448, %v446
        %v479 = vpack.c.b16 %v451, %v449
        %v480 = vpack.c.b16 %v452, %v450
        %v481 = vpack.c.b16 %v455, %v453
        %v482 = vpack.c.b16 %v456, %v454
        %v483 = vpack.c.b16 %v459, %v457
        %v484 = vpack.c.b16 %v460, %v458
        %v485 = vpack.c.b16 %v463, %v461
        %v486 = vpack.c.b16 %v464, %v462
        %v487 = vpack.c.b16 %v467, %v465
        %v488 = vpack.c.b16 %v468, %v466
        %v489 = vpack.c.b16 %v471, %v469
        %v490 = vpack.c.b16 %v472, %v470
        %v491 = vpack.c.b16 %v475, %v473
        %v492 = vpack.c.b16 %v476, %v474
        %v541 = vunpack.c.l.b16 %v390
        %v542 = vunpack.c.l.b16 %v391
        %v543 = vunpack.c.l.b16 %v392
        %v544 = vunpack.c.l.b16 %v393
        %v545 = vunpack.c.l.b16 %v394
        %v546 = vunpack.c.l.b16 %v395
        %v547 = vunpack.c.l.b16 %v396
        %v548 = vunpack.c.l.b16 %v397
        %v549 = vunpack.c.l.b16 %v398
        %v550 = vunpack.c.l.b16 %v399
        %v551 = vunpack.c.l.b16 %v400
        %v552 = vunpack.c.l.b16 %v401
        %v553 = vunpack.c.l.b16 %v402
        %v554 = vunpack.c.l.b16 %v403
        %v555 = vunpack.c.l.b16 %v404
        %v556 = vunpack.c.l.b16 %v405
        %v557 = vunpack.c.l.b16 %v406
        %v558 = vunpack.c.l.b16 %v407
        %v559 = vunpack.c.l.b16 %v408
        %v560 = vunpack.c.l.b16 %v409
        %v561 = vunpack.c.l.b16 %v410
        %v562 = vunpack.c.l.b16 %v411
        %v563 = vunpack.c.l.b16 %v412
        %v564 = vunpack.c.l.b16 %v413
        %v565 = vunpack.c.l.b16 %v414
        %v566 = vunpack.c.l.b16 %v415
        %v567 = vunpack.c.l.b16 %v416
        %v568 = vunpack.c.l.b16 %v417
        %v569 = vunpack.c.l.b16 %v418
        %v570 = vunpack.c.l.b16 %v419
        %v571 = vunpack.c.l.b16 %v420
        %v572 = vunpack.c.l.b16 %v421
        %v573 = vpack.c.b16 %v542, %v541
        %v574 = vpack.c.b16 %v544, %v543
        %v575 = vpack.c.b16 %v546, %v545
        %v576 = vpack.c.b16 %v548, %v547
        %v577 = vpack.c.b16 %v550, %v549
        %v578 = vpack.c.b16 %v552, %v551
        %v579 = vpack.c.b16 %v554, %v553
        %v580 = vpack.c.b16 %v556, %v555
        %v581 = vpack.c.b16 %v558, %v557
        %v582 = vpack.c.b16 %v560, %v559
        %v583 = vpack.c.b16 %v562, %v561
        %v584 = vpack.c.b16 %v564, %v563
        %v585 = vpack.c.b16 %v566, %v565
        %v586 = vpack.c.b16 %v568, %v567
        %v587 = vpack.c.b16 %v570, %v569
        %v588 = vpack.c.b16 %v572, %v571
        %605 = vmatprep.subr.bf16.mxu0 0
        %606 = vmatpush1.bf16.msra.mxu0 %v573
        %607 = vmatprep.subr.bf16.mxu0 0
        %608 = vmatpush1.bf16.msra.mxu0 %v574
        %609 = vmatprep.subr.bf16.mxu0 0
        %610 = vmatpush1.bf16.msra.mxu0 %v575
        %611 = vmatprep.subr.bf16.mxu0 0
        %612 = vmatpush1.bf16.msra.mxu0 %v576
        %613 = vmatprep.subr.bf16.mxu0 0
        %614 = vmatpush1.bf16.msra.mxu0 %v577
        %615 = vmatprep.subr.bf16.mxu0 0
        %616 = vmatpush1.bf16.msra.mxu0 %v578
        %617 = vmatprep.subr.bf16.mxu0 0
        %618 = vmatpush1.bf16.msra.mxu0 %v579
        %619 = vmatprep.subr.bf16.mxu0 0
        %620 = vmatpush1.bf16.msra.mxu0 %v580
        %621 = vmatprep.subr.bf16.mxu0 0
        %622 = vmatpush1.bf16.msra.mxu0 %v581
        %623 = vmatprep.subr.bf16.mxu0 0
        %624 = vmatpush1.bf16.msra.mxu0 %v582
        %625 = vmatprep.subr.bf16.mxu0 0
        %626 = vmatpush1.bf16.msra.mxu0 %v583
        %627 = vmatprep.subr.bf16.mxu0 0
        %628 = vmatpush1.bf16.msra.mxu0 %v584
        %629 = vmatprep.subr.bf16.mxu0 0
        %630 = vmatpush1.bf16.msra.mxu0 %v585
        %631 = vmatprep.subr.bf16.mxu0 0
        %632 = vmatpush1.bf16.msra.mxu0 %v586
        %633 = vmatprep.subr.bf16.mxu0 0
        %634 = vmatpush1.bf16.msra.mxu0 %v587
        %635 = vmatprep.subr.bf16.mxu0 0
        %636 = vmatpush1.bf16.msra.mxu0 %v588
        %637 = vmatprep.mubr.bf16.mxu0 %v478
        %638 = vmatmul.mubr.bf16.gmra.mrb[0].mxu0 %v477
        %v639 = vpop.f32.mrb[0].mxu0
        %v640 = vadd.f32 %v427, %v639
        %v641 = vpop.f32.mrb[0].mxu0
        %v642 = vpop.f32.mrb[0].mxu0
        %v643 = vadd.f32 %v427, %v642
        %v644 = vpop.f32.mrb[0].mxu0
        %645 = vmatprep.mubr.bf16.mxu0 %v480
        %646 = vmatmul.mubr.bf16.gmra.mrb[0].mxu0 %v479
        %v647 = vpop.f32.mrb[0].mxu0
        %v648 = vadd.f32 %v427, %v647
        %v649 = vpop.f32.mrb[0].mxu0
        %v650 = vpop.f32.mrb[0].mxu0
        %v651 = vadd.f32 %v427, %v650
        %v652 = vpop.f32.mrb[0].mxu0
        %653 = vmatprep.mubr.bf16.mxu0 %v482
        %654 = vmatmul.mubr.bf16.gmra.mrb[0].mxu0 %v481
        %v655 = vpop.f32.mrb[0].mxu0
        %v656 = vadd.f32 %v427, %v655
        %v657 = vpop.f32.mrb[0].mxu0
        %v658 = vpop.f32.mrb[0].mxu0
        %v659 = vadd.f32 %v427, %v658
        %v660 = vpop.f32.mrb[0].mxu0
        %661 = vmatprep.mubr.bf16.mxu0 %v484
        %662 = vmatmul.mubr.bf16.gmra.mrb[0].mxu0 %v483
        %v663 = vpop.f32.mrb[0].mxu0
        %v664 = vadd.f32 %v427, %v663
        %v665 = vpop.f32.mrb[0].mxu0
        %v666 = vpop.f32.mrb[0].mxu0
        %v667 = vadd.f32 %v427, %v666
        %v668 = vpop.f32.mrb[0].mxu0
        %669 = vmatprep.mubr.bf16.mxu0 %v486
        %670 = vmatmul.mubr.bf16.gmra.mrb[0].mxu0 %v485
        %v671 = vpop.f32.mrb[0].mxu0
        %v672 = vadd.f32 %v427, %v671
        %v673 = vpop.f32.mrb[0].mxu0
        %v674 = vpop.f32.mrb[0].mxu0
        %v675 = vadd.f32 %v427, %v674
        %v676 = vpop.f32.mrb[0].mxu0
        %677 = vmatprep.mubr.bf16.mxu0 %v488
        %678 = vmatmul.mubr.bf16.gmra.mrb[0].mxu0 %v487
        %v679 = vpop.f32.mrb[0].mxu0
        %v680 = vadd.f32 %v427, %v679
        %v681 = vpop.f32.mrb[0].mxu0
        %v682 = vpop.f32.mrb[0].mxu0
        %v683 = vadd.f32 %v427, %v682
        %v684 = vpop.f32.mrb[0].mxu0
        %685 = vmatprep.mubr.bf16.mxu0 %v490
        %686 = vmatmul.mubr.bf16.gmra.mrb[0].mxu0 %v489
        %v687 = vpop.f32.mrb[0].mxu0
        %v688 = vadd.f32 %v427, %v687
        %v689 = vpop.f32.mrb[0].mxu0
        %v690 = vpop.f32.mrb[0].mxu0
        %v691 = vadd.f32 %v427, %v690
        %v692 = vpop.f32.mrb[0].mxu0
        %693 = vmatprep.mubr.bf16.mxu0 %v492
        %694 = vmatmul.mubr.bf16.gmra.mrb[0].mxu0 %v491
        %v695 = vpop.f32.mrb[0].mxu0
        %v696 = vadd.f32 %v427, %v695
        %v697 = vpop.f32.mrb[0].mxu0
        %v698 = vpop.f32.mrb[0].mxu0
        %v699 = vadd.f32 %v427, %v698
        %v700 = vpop.f32.mrb[0].mxu0
        %701 = vdwg.mxu0
        %702 = vmax.xlane.f32.xlu0 %v640
        %v703 = vpop.xlane.xlu0 %702
        %704 = vmax.xlane.f32.xlu0 %v643
        %v705 = vpop.xlane.xlu0 %704
        %706 = vmax.xlane.f32.xlu0 %v648
        %v707 = vpop.xlane.xlu0 %706
        %708 = vmax.xlane.f32.xlu0 %v651
        %v709 = vpop.xlane.xlu0 %708
        %710 = vmax.xlane.f32.xlu0 %v656
        %v711 = vpop.xlane.xlu0 %710
        %712 = vmax.xlane.f32.xlu0 %v659
        %v713 = vpop.xlane.xlu0 %712
        %714 = vmax.xlane.f32.xlu0 %v664
        %v715 = vpop.xlane.xlu0 %714
        %716 = vmax.xlane.f32.xlu0 %v667
        %v717 = vpop.xlane.xlu0 %716
        %718 = vmax.xlane.f32.xlu0 %v672
        %v719 = vpop.xlane.xlu0 %718
        %720 = vmax.xlane.f32.xlu0 %v675
        %v721 = vpop.xlane.xlu0 %720
        %722 = vmax.xlane.f32.xlu0 %v680
        %v723 = vpop.xlane.xlu0 %722
        %724 = vmax.xlane.f32.xlu0 %v683
        %v725 = vpop.xlane.xlu0 %724
        %726 = vmax.xlane.f32.xlu0 %v688
        %v727 = vpop.xlane.xlu0 %726
        %728 = vmax.xlane.f32.xlu0 %v691
        %v729 = vpop.xlane.xlu0 %728
        %730 = vmax.xlane.f32.xlu0 %v696
        %v731 = vpop.xlane.xlu0 %730
        %732 = vmax.xlane.f32.xlu0 %v699
        %v733 = vpop.xlane.xlu0 %732
        %v734 = vsub.f32 %v640, %v703
        %v735 = vsub.f32 %v643, %v705
        %v736 = vsub.f32 %v648, %v707
        %v737 = vsub.f32 %v651, %v709
        %v738 = vsub.f32 %v656, %v711
        %v739 = vsub.f32 %v659, %v713
        %v740 = vsub.f32 %v664, %v715
        %v741 = vsub.f32 %v667, %v717
        %v742 = vsub.f32 %v672, %v719
        %v743 = vsub.f32 %v675, %v721
        %v744 = vsub.f32 %v680, %v723
        %v745 = vsub.f32 %v683, %v725
        %v746 = vsub.f32 %v688, %v727
        %v747 = vsub.f32 %v691, %v729
        %v748 = vsub.f32 %v696, %v731
        %v749 = vsub.f32 %v699, %v733
        %v750 = vmul.f32 %v734, 1.442695
        %v751 = vpow.pop %v750
        %v752 = vmul.f32 %v735, 1.442695
        %v753 = vpow.pop %v752
        %v754 = vmul.f32 %v736, 1.442695
        %v755 = vpow.pop %v754
        %v756 = vmul.f32 %v737, 1.442695
        %v757 = vpow.pop %v756
        %v758 = vmul.f32 %v738, 1.442695
        %v759 = vpow.pop %v758
        %v760 = vmul.f32 %v739, 1.442695
        %v761 = vpow.pop %v760
        %v762 = vmul.f32 %v740, 1.442695
        %v763 = vpow.pop %v762
        %v764 = vmul.f32 %v741, 1.442695
        %v765 = vpow.pop %v764
        %v766 = vmul.f32 %v742, 1.442695
        %v767 = vpow.pop %v766
        %v768 = vmul.f32 %v743, 1.442695
        %v769 = vpow.pop %v768
        %v770 = vmul.f32 %v744, 1.442695
        %v771 = vpow.pop %v770
        %v772 = vmul.f32 %v745, 1.442695
        %v773 = vpow.pop %v772
        %v774 = vmul.f32 %v746, 1.442695
        %v775 = vpow.pop %v774
        %v776 = vmul.f32 %v747, 1.442695
        %v777 = vpow.pop %v776
        %v778 = vmul.f32 %v748, 1.442695
        %v779 = vpow.pop %v778
        %v780 = vmul.f32 %v749, 1.442695
        %v781 = vpow.pop %v780
        %782 = vadd.xlane.f32.xlu0 %v751
        %v783 = vpop.xlane.xlu0 %782
        %784 = vadd.xlane.f32.xlu0 %v753
        %v785 = vpop.xlane.xlu0 %784
        %786 = vadd.xlane.f32.xlu0 %v755
        %v787 = vpop.xlane.xlu0 %786
        %788 = vadd.xlane.f32.xlu0 %v757
        %v789 = vpop.xlane.xlu0 %788
        %790 = vadd.xlane.f32.xlu0 %v759
        %v791 = vpop.xlane.xlu0 %790
        %792 = vadd.xlane.f32.xlu0 %v761
        %v793 = vpop.xlane.xlu0 %792
        %794 = vadd.xlane.f32.xlu0 %v763
        %v795 = vpop.xlane.xlu0 %794
        %796 = vadd.xlane.f32.xlu0 %v765
        %v797 = vpop.xlane.xlu0 %796
        %798 = vadd.xlane.f32.xlu0 %v767
        %v799 = vpop.xlane.xlu0 %798
        %800 = vadd.xlane.f32.xlu0 %v769
        %v801 = vpop.xlane.xlu0 %800
        %802 = vadd.xlane.f32.xlu0 %v771
        %v803 = vpop.xlane.xlu0 %802
        %804 = vadd.xlane.f32.xlu0 %v773
        %v805 = vpop.xlane.xlu0 %804
        %806 = vadd.xlane.f32.xlu0 %v775
        %v807 = vpop.xlane.xlu0 %806
        %808 = vadd.xlane.f32.xlu0 %v777
        %v809 = vpop.xlane.xlu0 %808
        %810 = vadd.xlane.f32.xlu0 %v779
        %v811 = vpop.xlane.xlu0 %810
        %812 = vadd.xlane.f32.xlu0 %v781
        %v813 = vpop.xlane.xlu0 %812
        %v814 = vrcp.pop %v783
        %v815 = vmul.f32 %v751, %v814
        %v816 = vrcp.pop %v785
        %v817 = vmul.f32 %v753, %v816
        %v818 = vrcp.pop %v787
        %v819 = vmul.f32 %v755, %v818
        %v820 = vrcp.pop %v789
        %v821 = vmul.f32 %v757, %v820
        %v822 = vrcp.pop %v791
        %v823 = vmul.f32 %v759, %v822
        %v824 = vrcp.pop %v793
        %v825 = vmul.f32 %v761, %v824
        %v826 = vrcp.pop %v795
        %v827 = vmul.f32 %v763, %v826
        %v828 = vrcp.pop %v797
        %v829 = vmul.f32 %v765, %v828
        %v830 = vrcp.pop %v799
        %v831 = vmul.f32 %v767, %v830
        %v832 = vrcp.pop %v801
        %v833 = vmul.f32 %v769, %v832
        %v834 = vrcp.pop %v803
        %v835 = vmul.f32 %v771, %v834
        %v836 = vrcp.pop %v805
        %v837 = vmul.f32 %v773, %v836
        %v838 = vrcp.pop %v807
        %v839 = vmul.f32 %v775, %v838
        %v840 = vrcp.pop %v809
        %v841 = vmul.f32 %v777, %v840
        %v842 = vrcp.pop %v811
        %v843 = vmul.f32 %v779, %v842
        %v844 = vrcp.pop %v813
        %v845 = vmul.f32 %v781, %v844
        %v846 = vlog2.pop %v783
        %v847 = vmul.f32 %v846, 0.6931472
        %v848 = vlog2.pop %v785
        %v849 = vmul.f32 %v848, 0.6931472
        %v850 = vlog2.pop %v787
        %v851 = vmul.f32 %v850, 0.6931472
        %v852 = vlog2.pop %v789
        %v853 = vmul.f32 %v852, 0.6931472
        %v854 = vlog2.pop %v791
        %v855 = vmul.f32 %v854, 0.6931472
        %v856 = vlog2.pop %v793
        %v857 = vmul.f32 %v856, 0.6931472
        %v858 = vlog2.pop %v795
        %v859 = vmul.f32 %v858, 0.6931472
        %v860 = vlog2.pop %v797
        %v861 = vmul.f32 %v860, 0.6931472
        %v862 = vlog2.pop %v799
        %v863 = vmul.f32 %v862, 0.6931472
        %v864 = vlog2.pop %v801
        %v865 = vmul.f32 %v864, 0.6931472
        %v866 = vlog2.pop %v803
        %v867 = vmul.f32 %v866, 0.6931472
        %v868 = vlog2.pop %v805
        %v869 = vmul.f32 %v868, 0.6931472
        %v870 = vlog2.pop %v807
        %v871 = vmul.f32 %v870, 0.6931472
        %v872 = vlog2.pop %v809
        %v873 = vmul.f32 %v872, 0.6931472
        %v874 = vlog2.pop %v811
        %v875 = vmul.f32 %v874, 0.6931472
        %v876 = vlog2.pop %v813
        %v877 = vmul.f32 %v876, 0.6931472
        %v878 = vsub.f32 %v734, %v847
        %v879 = vsub.f32 %v735, %v849
        %v880 = vsub.f32 %v736, %v851
        %v881 = vsub.f32 %v737, %v853
        %v882 = vsub.f32 %v738, %v855
        %v883 = vsub.f32 %v739, %v857
        %v884 = vsub.f32 %v740, %v859
        %v885 = vsub.f32 %v741, %v861
        %v886 = vsub.f32 %v742, %v863
        %v887 = vsub.f32 %v743, %v865
        %v888 = vsub.f32 %v744, %v867
        %v889 = vsub.f32 %v745, %v869
        %v890 = vsub.f32 %v746, %v871
        %v891 = vsub.f32 %v747, %v873
        %v892 = vsub.f32 %v748, %v875
        %v893 = vsub.f32 %v749, %v877
        %v894 = vlaneseq
        %v895 = vand.u32 %v894, 127
        %vm896 = vcmp.eq.f32.partialorder %v734, 0.0
        %vm897 = vcmp.eq.f32.partialorder %v735, 0.0
        %vm898 = vcmp.eq.f32.partialorder %v736, 0.0
        %vm899 = vcmp.eq.f32.partialorder %v737, 0.0
        %vm900 = vcmp.eq.f32.partialorder %v738, 0.0
        %vm901 = vcmp.eq.f32.partialorder %v739, 0.0
        %vm902 = vcmp.eq.f32.partialorder %v740, 0.0
        %vm903 = vcmp.eq.f32.partialorder %v741, 0.0
        %vm904 = vcmp.eq.f32.partialorder %v742, 0.0
        %vm905 = vcmp.eq.f32.partialorder %v743, 0.0
        %vm906 = vcmp.eq.f32.partialorder %v744, 0.0
        %vm907 = vcmp.eq.f32.partialorder %v745, 0.0
        %vm908 = vcmp.eq.f32.partialorder %v746, 0.0
        %vm909 = vcmp.eq.f32.partialorder %v747, 0.0
        %vm910 = vcmp.eq.f32.partialorder %v748, 0.0
        %vm911 = vcmp.eq.f32.partialorder %v749, 0.0
        %v912 = vsel %vm896, %v895, 128
        %v913 = vsel %vm897, %v895, 128
        %v914 = vsel %vm898, %v895, 128
        %v915 = vsel %vm899, %v895, 128
        %v916 = vsel %vm900, %v895, 128
        %v917 = vsel %vm901, %v895, 128
        %v918 = vsel %vm902, %v895, 128
        %v919 = vsel %vm903, %v895, 128
        %v920 = vsel %vm904, %v895, 128
        %v921 = vsel %vm905, %v895, 128
        %v922 = vsel %vm906, %v895, 128
        %v923 = vsel %vm907, %v895, 128
        %v924 = vsel %vm908, %v895, 128
        %v925 = vsel %vm909, %v895, 128
        %v926 = vsel %vm910, %v895, 128
        %v927 = vsel %vm911, %v895, 128
        %v928 = vand.u32 %v912, 65535
        %v929 = vshra.s32 %v912, 16
        %v930 = vcvt.s32.f32 %v928
        %v931 = vcvt.s32.f32 %v929
        %932 = vmin.xlane.f32.xlu0 %v931
        %v933 = vpop.xlane.xlu0 %932
        %vm934 = vcmp.eq.f32.partialorder %v931, %v933
        %v935 = vsel %vm934, %v930, inf
        %936 = vmin.xlane.f32.xlu0 %v935
        %v937 = vpop.xlane.xlu0 %936
        %v938 = vcvt.f32.s32 %v937
        %v939 = vcvt.f32.s32 %v933
        %v940 = vshll.u32 %v939, 16
        %v941 = vadd.s32 %v940, %v938
        %v942 = vand.u32 %v913, 65535
        %v943 = vshra.s32 %v913, 16
        %v944 = vcvt.s32.f32 %v942
        %v945 = vcvt.s32.f32 %v943
        %946 = vmin.xlane.f32.xlu0 %v945
        %v947 = vpop.xlane.xlu0 %946
        %vm948 = vcmp.eq.f32.partialorder %v945, %v947
        %v949 = vsel %vm948, %v944, inf
        %950 = vmin.xlane.f32.xlu0 %v949
        %v951 = vpop.xlane.xlu0 %950
        %v952 = vcvt.f32.s32 %v951
        %v953 = vcvt.f32.s32 %v947
        %v954 = vshll.u32 %v953, 16
        %v955 = vadd.s32 %v954, %v952
        %v956 = vand.u32 %v914, 65535
        %v957 = vshra.s32 %v914, 16
        %v958 = vcvt.s32.f32 %v956
        %v959 = vcvt.s32.f32 %v957
        %960 = vmin.xlane.f32.xlu0 %v959
        %v961 = vpop.xlane.xlu0 %960
        %vm962 = vcmp.eq.f32.partialorder %v959, %v961
        %v963 = vsel %vm962, %v958, inf
        %964 = vmin.xlane.f32.xlu0 %v963
        %v965 = vpop.xlane.xlu0 %964
        %v966 = vcvt.f32.s32 %v965
        %v967 = vcvt.f32.s32 %v961
        %v968 = vshll.u32 %v967, 16
        %v969 = vadd.s32 %v968, %v966
        %v970 = vand.u32 %v915, 65535
        %v971 = vshra.s32 %v915, 16
        %v972 = vcvt.s32.f32 %v970
        %v973 = vcvt.s32.f32 %v971
        %974 = vmin.xlane.f32.xlu0 %v973
        %v975 = vpop.xlane.xlu0 %974
        %vm976 = vcmp.eq.f32.partialorder %v973, %v975
        %v977 = vsel %vm976, %v972, inf
        %978 = vmin.xlane.f32.xlu0 %v977
        %v979 = vpop.xlane.xlu0 %978
        %v980 = vcvt.f32.s32 %v979
        %v981 = vcvt.f32.s32 %v975
        %v982 = vshll.u32 %v981, 16
        %v983 = vadd.s32 %v982, %v980
        %v984 = vand.u32 %v916, 65535
        %v985 = vshra.s32 %v916, 16
        %v986 = vcvt.s32.f32 %v984
        %v987 = vcvt.s32.f32 %v985
        %988 = vmin.xlane.f32.xlu0 %v987
        %v989 = vpop.xlane.xlu0 %988
        %vm990 = vcmp.eq.f32.partialorder %v987, %v989
        %v991 = vsel %vm990, %v986, inf
        %992 = vmin.xlane.f32.xlu0 %v991
        %v993 = vpop.xlane.xlu0 %992
        %v994 = vcvt.f32.s32 %v993
        %v995 = vcvt.f32.s32 %v989
        %v996 = vshll.u32 %v995, 16
        %v997 = vadd.s32 %v996, %v994
        %v998 = vand.u32 %v917, 65535
        %v999 = vshra.s32 %v917, 16
        %v1000 = vcvt.s32.f32 %v998
        %v1001 = vcvt.s32.f32 %v999
        %1002 = vmin.xlane.f32.xlu0 %v1001
        %v1003 = vpop.xlane.xlu0 %1002
        %vm1004 = vcmp.eq.f32.partialorder %v1001, %v1003
        %v1005 = vsel %vm1004, %v1000, inf
        %1006 = vmin.xlane.f32.xlu0 %v1005
        %v1007 = vpop.xlane.xlu0 %1006
        %v1008 = vcvt.f32.s32 %v1007
        %v1009 = vcvt.f32.s32 %v1003
        %v1010 = vshll.u32 %v1009, 16
        %v1011 = vadd.s32 %v1010, %v1008
        %v1012 = vand.u32 %v918, 65535
        %v1013 = vshra.s32 %v918, 16
        %v1014 = vcvt.s32.f32 %v1012
        %v1015 = vcvt.s32.f32 %v1013
        %1016 = vmin.xlane.f32.xlu0 %v1015
        %v1017 = vpop.xlane.xlu0 %1016
        %vm1018 = vcmp.eq.f32.partialorder %v1015, %v1017
        %v1019 = vsel %vm1018, %v1014, inf
        %1020 = vmin.xlane.f32.xlu0 %v1019
        %v1021 = vpop.xlane.xlu0 %1020
        %v1022 = vcvt.f32.s32 %v1021
        %v1023 = vcvt.f32.s32 %v1017
        %v1024 = vshll.u32 %v1023, 16
        %v1025 = vadd.s32 %v1024, %v1022
        %v1026 = vand.u32 %v919, 65535
        %v1027 = vshra.s32 %v919, 16
        %v1028 = vcvt.s32.f32 %v1026
        %v1029 = vcvt.s32.f32 %v1027
        %1030 = vmin.xlane.f32.xlu0 %v1029
        %v1031 = vpop.xlane.xlu0 %1030
        %vm1032 = vcmp.eq.f32.partialorder %v1029, %v1031
        %v1033 = vsel %vm1032, %v1028, inf
        %1034 = vmin.xlane.f32.xlu0 %v1033
        %v1035 = vpop.xlane.xlu0 %1034
        %v1036 = vcvt.f32.s32 %v1035
        %v1037 = vcvt.f32.s32 %v1031
        %v1038 = vshll.u32 %v1037, 16
        %v1039 = vadd.s32 %v1038, %v1036
        %v1040 = vand.u32 %v920, 65535
        %v1041 = vshra.s32 %v920, 16
        %v1042 = vcvt.s32.f32 %v1040
        %v1043 = vcvt.s32.f32 %v1041
        %1044 = vmin.xlane.f32.xlu0 %v1043
        %v1045 = vpop.xlane.xlu0 %1044
        %vm1046 = vcmp.eq.f32.partialorder %v1043, %v1045
        %v1047 = vsel %vm1046, %v1042, inf
        %1048 = vmin.xlane.f32.xlu0 %v1047
        %v1049 = vpop.xlane.xlu0 %1048
        %v1050 = vcvt.f32.s32 %v1049
        %v1051 = vcvt.f32.s32 %v1045
        %v1052 = vshll.u32 %v1051, 16
        %v1053 = vadd.s32 %v1052, %v1050
        %v1054 = vand.u32 %v921, 65535
        %v1055 = vshra.s32 %v921, 16
        %v1056 = vcvt.s32.f32 %v1054
        %v1057 = vcvt.s32.f32 %v1055
        %1058 = vmin.xlane.f32.xlu0 %v1057
        %v1059 = vpop.xlane.xlu0 %1058
        %vm1060 = vcmp.eq.f32.partialorder %v1057, %v1059
        %v1061 = vsel %vm1060, %v1056, inf
        %1062 = vmin.xlane.f32.xlu0 %v1061
        %v1063 = vpop.xlane.xlu0 %1062
        %v1064 = vcvt.f32.s32 %v1063
        %v1065 = vcvt.f32.s32 %v1059
        %v1066 = vshll.u32 %v1065, 16
        %v1067 = vadd.s32 %v1066, %v1064
        %v1068 = vand.u32 %v922, 65535
        %v1069 = vshra.s32 %v922, 16
        %v1070 = vcvt.s32.f32 %v1068
        %v1071 = vcvt.s32.f32 %v1069
        %1072 = vmin.xlane.f32.xlu0 %v1071
        %v1073 = vpop.xlane.xlu0 %1072
        %vm1074 = vcmp.eq.f32.partialorder %v1071, %v1073
        %v1075 = vsel %vm1074, %v1070, inf
        %1076 = vmin.xlane.f32.xlu0 %v1075
        %v1077 = vpop.xlane.xlu0 %1076
        %v1078 = vcvt.f32.s32 %v1077
        %v1079 = vcvt.f32.s32 %v1073
        %v1080 = vshll.u32 %v1079, 16
        %v1081 = vadd.s32 %v1080, %v1078
        %v1082 = vand.u32 %v923, 65535
        %v1083 = vshra.s32 %v923, 16
        %v1084 = vcvt.s32.f32 %v1082
        %v1085 = vcvt.s32.f32 %v1083
        %1086 = vmin.xlane.f32.xlu0 %v1085
        %v1087 = vpop.xlane.xlu0 %1086
        %vm1088 = vcmp.eq.f32.partialorder %v1085, %v1087
        %v1089 = vsel %vm1088, %v1084, inf
        %1090 = vmin.xlane.f32.xlu0 %v1089
        %v1091 = vpop.xlane.xlu0 %1090
        %v1092 = vcvt.f32.s32 %v1091
        %v1093 = vcvt.f32.s32 %v1087
        %v1094 = vshll.u32 %v1093, 16
        %v1095 = vadd.s32 %v1094, %v1092
        %v1096 = vand.u32 %v924, 65535
        %v1097 = vshra.s32 %v924, 16
        %v1098 = vcvt.s32.f32 %v1096
        %v1099 = vcvt.s32.f32 %v1097
        %1100 = vmin.xlane.f32.xlu0 %v1099
        %v1101 = vpop.xlane.xlu0 %1100
        %vm1102 = vcmp.eq.f32.partialorder %v1099, %v1101
        %v1103 = vsel %vm1102, %v1098, inf
        %1104 = vmin.xlane.f32.xlu0 %v1103
        %v1105 = vpop.xlane.xlu0 %1104
        %v1106 = vcvt.f32.s32 %v1105
        %v1107 = vcvt.f32.s32 %v1101
        %v1108 = vshll.u32 %v1107, 16
        %v1109 = vadd.s32 %v1108, %v1106
        %v1110 = vand.u32 %v925, 65535
        %v1111 = vshra.s32 %v925, 16
        %v1112 = vcvt.s32.f32 %v1110
        %v1113 = vcvt.s32.f32 %v1111
        %1114 = vmin.xlane.f32.xlu0 %v1113
        %v1115 = vpop.xlane.xlu0 %1114
        %vm1116 = vcmp.eq.f32.partialorder %v1113, %v1115
        %v1117 = vsel %vm1116, %v1112, inf
        %1118 = vmin.xlane.f32.xlu0 %v1117
        %v1119 = vpop.xlane.xlu0 %1118
        %v1120 = vcvt.f32.s32 %v1119
        %v1121 = vcvt.f32.s32 %v1115
        %v1122 = vshll.u32 %v1121, 16
        %v1123 = vadd.s32 %v1122, %v1120
        %v1124 = vand.u32 %v926, 65535
        %v1125 = vshra.s32 %v926, 16
        %v1126 = vcvt.s32.f32 %v1124
        %v1127 = vcvt.s32.f32 %v1125
        %1128 = vmin.xlane.f32.xlu0 %v1127
        %v1129 = vpop.xlane.xlu0 %1128
        %vm1130 = vcmp.eq.f32.partialorder %v1127, %v1129
        %v1131 = vsel %vm1130, %v1126, inf
        %1132 = vmin.xlane.f32.xlu0 %v1131
        %v1133 = vpop.xlane.xlu0 %1132
        %v1134 = vcvt.f32.s32 %v1133
        %v1135 = vcvt.f32.s32 %v1129
        %v1136 = vshll.u32 %v1135, 16
        %v1137 = vadd.s32 %v1136, %v1134
        %v1138 = vand.u32 %v927, 65535
        %v1139 = vshra.s32 %v927, 16
        %v1140 = vcvt.s32.f32 %v1138
        %v1141 = vcvt.s32.f32 %v1139
        %1142 = vmin.xlane.f32.xlu0 %v1141
        %v1143 = vpop.xlane.xlu0 %1142
        %vm1144 = vcmp.eq.f32.partialorder %v1141, %v1143
        %v1145 = vsel %vm1144, %v1140, inf
        %1146 = vmin.xlane.f32.xlu0 %v1145
        %v1147 = vpop.xlane.xlu0 %1146
        %v1148 = vcvt.f32.s32 %v1147
        %v1149 = vcvt.f32.s32 %v1143
        %v1150 = vshll.u32 %v1149, 16
        %v1151 = vadd.s32 %v1150, %v1148
        %vm1152 = vcmp.eq.s32.totalorder %v895, %v941
        %vm1153 = vcmp.eq.s32.totalorder %v895, %v955
        %vm1154 = vcmp.eq.s32.totalorder %v895, %v969
        %vm1155 = vcmp.eq.s32.totalorder %v895, %v983
        %vm1156 = vcmp.eq.s32.totalorder %v895, %v997
        %vm1157 = vcmp.eq.s32.totalorder %v895, %v1011
        %vm1158 = vcmp.eq.s32.totalorder %v895, %v1025
        %vm1159 = vcmp.eq.s32.totalorder %v895, %v1039
        %vm1160 = vcmp.eq.s32.totalorder %v895, %v1053
        %vm1161 = vcmp.eq.s32.totalorder %v895, %v1067
        %vm1162 = vcmp.eq.s32.totalorder %v895, %v1081
        %vm1163 = vcmp.eq.s32.totalorder %v895, %v1095
        %vm1164 = vcmp.eq.s32.totalorder %v895, %v1109
        %vm1165 = vcmp.eq.s32.totalorder %v895, %v1123
        %vm1166 = vcmp.eq.s32.totalorder %v895, %v1137
        %vm1167 = vcmp.eq.s32.totalorder %v895, %v1151
        %v1168 = vsel %vm1152, 1, 0
        %v1169 = vsel %vm1153, 1, 0
        %v1170 = vsel %vm1154, 1, 0
        %v1171 = vsel %vm1155, 1, 0
        %v1172 = vsel %vm1156, 1, 0
        %v1173 = vsel %vm1157, 1, 0
        %v1174 = vsel %vm1158, 1, 0
        %v1175 = vsel %vm1159, 1, 0
        %v1176 = vsel %vm1160, 1, 0
        %v1177 = vsel %vm1161, 1, 0
        %v1178 = vsel %vm1162, 1, 0
        %v1179 = vsel %vm1163, 1, 0
        %v1180 = vsel %vm1164, 1, 0
        %v1181 = vsel %vm1165, 1, 0
        %v1182 = vsel %vm1166, 1, 0
        %v1183 = vsel %vm1167, 1, 0
        %v1184 = vcvt.s32.f32 %v1168
        %v1185 = vcvt.s32.f32 %v1169
        %v1186 = vcvt.s32.f32 %v1170
        %v1187 = vcvt.s32.f32 %v1171
        %v1188 = vcvt.s32.f32 %v1172
        %v1189 = vcvt.s32.f32 %v1173
        %v1190 = vcvt.s32.f32 %v1174
        %v1191 = vcvt.s32.f32 %v1175
        %v1192 = vcvt.s32.f32 %v1176
        %v1193 = vcvt.s32.f32 %v1177
        %v1194 = vcvt.s32.f32 %v1178
        %v1195 = vcvt.s32.f32 %v1179
        %v1196 = vcvt.s32.f32 %v1180
        %v1197 = vcvt.s32.f32 %v1181
        %v1198 = vcvt.s32.f32 %v1182
        %v1199 = vcvt.s32.f32 %v1183
        %vm1200 = vcmp.gt.f32.partialorder %v815, 0.25
        %vm1201 = vcmp.gt.f32.partialorder %v817, 0.25
        %vm1202 = vcmp.gt.f32.partialorder %v819, 0.25
        %vm1203 = vcmp.gt.f32.partialorder %v821, 0.25
        %vm1204 = vcmp.gt.f32.partialorder %v823, 0.25
        %vm1205 = vcmp.gt.f32.partialorder %v825, 0.25
        %vm1206 = vcmp.gt.f32.partialorder %v827, 0.25
        %vm1207 = vcmp.gt.f32.partialorder %v829, 0.25
        %vm1208 = vcmp.gt.f32.partialorder %v831, 0.25
        %vm1209 = vcmp.gt.f32.partialorder %v833, 0.25
        %vm1210 = vcmp.gt.f32.partialorder %v835, 0.25
        %vm1211 = vcmp.gt.f32.partialorder %v837, 0.25
        %vm1212 = vcmp.gt.f32.partialorder %v839, 0.25
        %vm1213 = vcmp.gt.f32.partialorder %v841, 0.25
        %vm1214 = vcmp.gt.f32.partialorder %v843, 0.25
        %vm1215 = vcmp.gt.f32.partialorder %v845, 0.25
        %v1216 = vsel %vm1200, 1, 0
        %v1217 = vsel %vm1201, 1, 0
        %v1218 = vsel %vm1202, 1, 0
        %v1219 = vsel %vm1203, 1, 0
        %v1220 = vsel %vm1204, 1, 0
        %v1221 = vsel %vm1205, 1, 0
        %v1222 = vsel %vm1206, 1, 0
        %v1223 = vsel %vm1207, 1, 0
        %v1224 = vsel %vm1208, 1, 0
        %v1225 = vsel %vm1209, 1, 0
        %v1226 = vsel %vm1210, 1, 0
        %v1227 = vsel %vm1211, 1, 0
        %v1228 = vsel %vm1212, 1, 0
        %v1229 = vsel %vm1213, 1, 0
        %v1230 = vsel %vm1214, 1, 0
        %v1231 = vsel %vm1215, 1, 0
        %v1232 = vcvt.s32.f32 %v1216
        %v1233 = vcvt.s32.f32 %v1217
        %v1234 = vcvt.s32.f32 %v1218
        %v1235 = vcvt.s32.f32 %v1219
        %v1236 = vcvt.s32.f32 %v1220
        %v1237 = vcvt.s32.f32 %v1221
        %v1238 = vcvt.s32.f32 %v1222
        %v1239 = vcvt.s32.f32 %v1223
        %v1240 = vcvt.s32.f32 %v1224
        %v1241 = vcvt.s32.f32 %v1225
        %v1242 = vcvt.s32.f32 %v1226
        %v1243 = vcvt.s32.f32 %v1227
        %v1244 = vcvt.s32.f32 %v1228
        %v1245 = vcvt.s32.f32 %v1229
        %v1246 = vcvt.s32.f32 %v1230
        %v1247 = vcvt.s32.f32 %v1231
        %1248 = vmax.xlane.f32.xlu0 %v1232
        %v1249 = vpop.xlane.xlu0 %1248
        %1250 = vmax.xlane.f32.xlu0 %v1233
        %v1251 = vpop.xlane.xlu0 %1250
        %1252 = vmax.xlane.f32.xlu0 %v1234
        %v1253 = vpop.xlane.xlu0 %1252
        %1254 = vmax.xlane.f32.xlu0 %v1235
        %v1255 = vpop.xlane.xlu0 %1254
        %1256 = vmax.xlane.f32.xlu0 %v1236
        %v1257 = vpop.xlane.xlu0 %1256
        %1258 = vmax.xlane.f32.xlu0 %v1237
        %v1259 = vpop.xlane.xlu0 %1258
        %1260 = vmax.xlane.f32.xlu0 %v1238
        %v1261 = vpop.xlane.xlu0 %1260
        %1262 = vmax.xlane.f32.xlu0 %v1239
        %v1263 = vpop.xlane.xlu0 %1262
        %1264 = vmax.xlane.f32.xlu0 %v1240
        %v1265 = vpop.xlane.xlu0 %1264
        %1266 = vmax.xlane.f32.xlu0 %v1241
        %v1267 = vpop.xlane.xlu0 %1266
        %1268 = vmax.xlane.f32.xlu0 %v1242
        %v1269 = vpop.xlane.xlu0 %1268
        %1270 = vmax.xlane.f32.xlu0 %v1243
        %v1271 = vpop.xlane.xlu0 %1270
        %1272 = vmax.xlane.f32.xlu0 %v1244
        %v1273 = vpop.xlane.xlu0 %1272
        %1274 = vmax.xlane.f32.xlu0 %v1245
        %v1275 = vpop.xlane.xlu0 %1274
        %1276 = vmax.xlane.f32.xlu0 %v1246
        %v1277 = vpop.xlane.xlu0 %1276
        %1278 = vmax.xlane.f32.xlu0 %v1247
        %v1279 = vpop.xlane.xlu0 %1278
        %v1280 = vsub.f32 1.0, %v1249
        %v1281 = vsub.f32 1.0, %v1251
        %v1282 = vsub.f32 1.0, %v1253
        %v1283 = vsub.f32 1.0, %v1255
        %v1284 = vsub.f32 1.0, %v1257
        %v1285 = vsub.f32 1.0, %v1259
        %v1286 = vsub.f32 1.0, %v1261
        %v1287 = vsub.f32 1.0, %v1263
        %v1288 = vsub.f32 1.0, %v1265
        %v1289 = vsub.f32 1.0, %v1267
        %v1290 = vsub.f32 1.0, %v1269
        %v1291 = vsub.f32 1.0, %v1271
        %v1292 = vsub.f32 1.0, %v1273
        %v1293 = vsub.f32 1.0, %v1275
        %v1294 = vsub.f32 1.0, %v1277
        %v1295 = vsub.f32 1.0, %v1279
        %v1296 = vmul.f32 %v1249, 16.0
        %v1297 = vmul.f32 %v1251, 16.0
        %v1298 = vmul.f32 %v1253, 16.0
        %v1299 = vmul.f32 %v1255, 16.0
        %v1300 = vmul.f32 %v1257, 16.0
        %v1301 = vmul.f32 %v1259, 16.0
        %v1302 = vmul.f32 %v1261, 16.0
        %v1303 = vmul.f32 %v1263, 16.0
        %v1304 = vmul.f32 %v1265, 16.0
        %v1305 = vmul.f32 %v1267, 16.0
        %v1306 = vmul.f32 %v1269, 16.0
        %v1307 = vmul.f32 %v1271, 16.0
        %v1308 = vmul.f32 %v1273, 16.0
        %v1309 = vmul.f32 %v1275, 16.0
        %v1310 = vmul.f32 %v1277, 16.0
        %v1311 = vmul.f32 %v1279, 16.0
        %v1312 = vmul.f32 %v1296, %v1184
        %v1313 = vmul.f32 %v1297, %v1185
        %v1314 = vmul.f32 %v1298, %v1186
        %v1315 = vmul.f32 %v1299, %v1187
        %v1316 = vmul.f32 %v1300, %v1188
        %v1317 = vmul.f32 %v1301, %v1189
        %v1318 = vmul.f32 %v1302, %v1190
        %v1319 = vmul.f32 %v1303, %v1191
        %v1320 = vmul.f32 %v1304, %v1192
        %v1321 = vmul.f32 %v1305, %v1193
        %v1322 = vmul.f32 %v1306, %v1194
        %v1323 = vmul.f32 %v1307, %v1195
        %v1324 = vmul.f32 %v1308, %v1196
        %v1325 = vmul.f32 %v1309, %v1197
        %v1326 = vmul.f32 %v1310, %v1198
        %v1327 = vmul.f32 %v1311, %v1199
        %v1328 = vmul.f32 %v1280, %v815
        %v1329 = vmul.f32 %v1281, %v817
        %v1330 = vmul.f32 %v1282, %v819
        %v1331 = vmul.f32 %v1283, %v821
        %v1332 = vmul.f32 %v1284, %v823
        %v1333 = vmul.f32 %v1285, %v825
        %v1334 = vmul.f32 %v1286, %v827
        %v1335 = vmul.f32 %v1287, %v829
        %v1336 = vmul.f32 %v1288, %v831
        %v1337 = vmul.f32 %v1289, %v833
        %v1338 = vmul.f32 %v1290, %v835
        %v1339 = vmul.f32 %v1291, %v837
        %v1340 = vmul.f32 %v1292, %v839
        %v1341 = vmul.f32 %v1293, %v841
        %v1342 = vmul.f32 %v1294, %v843
        %v1343 = vmul.f32 %v1295, %v845
        %v1344 = vadd.f32 %v1312, %v1328
        %v1345 = vadd.f32 %v1313, %v1329
        %v1346 = vadd.f32 %v1314, %v1330
        %v1347 = vadd.f32 %v1315, %v1331
        %v1348 = vadd.f32 %v1316, %v1332
        %v1349 = vadd.f32 %v1317, %v1333
        %v1350 = vadd.f32 %v1318, %v1334
        %v1351 = vadd.f32 %v1319, %v1335
        %v1352 = vadd.f32 %v1320, %v1336
        %v1353 = vadd.f32 %v1321, %v1337
        %v1354 = vadd.f32 %v1322, %v1338
        %v1355 = vadd.f32 %v1323, %v1339
        %v1356 = vadd.f32 %v1324, %v1340
        %v1357 = vadd.f32 %v1325, %v1341
        %v1358 = vadd.f32 %v1326, %v1342
        %v1359 = vadd.f32 %v1327, %v1343
        %v1360 = vmul.f32 %v1344, %v878
        %v1361 = vmul.f32 %v1345, %v879
        %v1362 = vmul.f32 %v1346, %v880
        %v1363 = vmul.f32 %v1347, %v881
        %v1364 = vmul.f32 %v1348, %v882
        %v1365 = vmul.f32 %v1349, %v883
        %v1366 = vmul.f32 %v1350, %v884
        %v1367 = vmul.f32 %v1351, %v885
        %v1368 = vmul.f32 %v1352, %v886
        %v1369 = vmul.f32 %v1353, %v887
        %v1370 = vmul.f32 %v1354, %v888
        %v1371 = vmul.f32 %v1355, %v889
        %v1372 = vmul.f32 %v1356, %v890
        %v1373 = vmul.f32 %v1357, %v891
        %v1374 = vmul.f32 %v1358, %v892
        %v1375 = vmul.f32 %v1359, %v893
        %1376 = vadd.xlane.f32.xlu0 %v1360
        %v1377 = vpop.xlane.xlu0 %1376
        %1378 = vadd.xlane.f32.xlu0 %v1361
        %v1379 = vpop.xlane.xlu0 %1378
        %1380 = vadd.xlane.f32.xlu0 %v1362
        %v1381 = vpop.xlane.xlu0 %1380
        %1382 = vadd.xlane.f32.xlu0 %v1363
        %v1383 = vpop.xlane.xlu0 %1382
        %1384 = vadd.xlane.f32.xlu0 %v1364
        %v1385 = vpop.xlane.xlu0 %1384
        %1386 = vadd.xlane.f32.xlu0 %v1365
        %v1387 = vpop.xlane.xlu0 %1386
        %1388 = vadd.xlane.f32.xlu0 %v1366
        %v1389 = vpop.xlane.xlu0 %1388
        %1390 = vadd.xlane.f32.xlu0 %v1367
        %v1391 = vpop.xlane.xlu0 %1390
        %1392 = vadd.xlane.f32.xlu0 %v1368
        %v1393 = vpop.xlane.xlu0 %1392
        %1394 = vadd.xlane.f32.xlu0 %v1369
        %v1395 = vpop.xlane.xlu0 %1394
        %1396 = vadd.xlane.f32.xlu0 %v1370
        %v1397 = vpop.xlane.xlu0 %1396
        %1398 = vadd.xlane.f32.xlu0 %v1371
        %v1399 = vpop.xlane.xlu0 %1398
        %1400 = vadd.xlane.f32.xlu0 %v1372
        %v1401 = vpop.xlane.xlu0 %1400
        %1402 = vadd.xlane.f32.xlu0 %v1373
        %v1403 = vpop.xlane.xlu0 %1402
        %1404 = vadd.xlane.f32.xlu0 %v1374
        %v1405 = vpop.xlane.xlu0 %1404
        %1406 = vadd.xlane.f32.xlu0 %v1375
        %v1407 = vpop.xlane.xlu0 %1406
        %v1408 = vsub.f32 0.0, %v1377
        %v1409 = vsub.f32 0.0, %v1379
        %v1410 = vsub.f32 0.0, %v1381
        %v1411 = vsub.f32 0.0, %v1383
        %v1412 = vsub.f32 0.0, %v1385
        %v1413 = vsub.f32 0.0, %v1387
        %v1414 = vsub.f32 0.0, %v1389
        %v1415 = vsub.f32 0.0, %v1391
        %v1416 = vsub.f32 0.0, %v1393
        %v1417 = vsub.f32 0.0, %v1395
        %v1418 = vsub.f32 0.0, %v1397
        %v1419 = vsub.f32 0.0, %v1399
        %v1420 = vsub.f32 0.0, %v1401
        %v1421 = vsub.f32 0.0, %v1403
        %v1422 = vsub.f32 0.0, %v1405
        %v1423 = vsub.f32 0.0, %v1407
        %s1424 = sld [smem:[#allocation6]]
        %v1425 = vmul.f32 %v1408, %v374
        %v1426 = vmul.f32 %v1409, %v375
        %v1427 = vmul.f32 %v1410, %v376
        %v1428 = vmul.f32 %v1411, %v377
        %v1429 = vmul.f32 %v1412, %v378
        %v1430 = vmul.f32 %v1413, %v379
        %v1431 = vmul.f32 %v1414, %v380
        %v1432 = vmul.f32 %v1415, %v381
        %v1433 = vmul.f32 %v1416, %v382
        %v1434 = vmul.f32 %v1417, %v383
        %v1435 = vmul.f32 %v1418, %v384
        %v1436 = vmul.f32 %v1419, %v385
        %v1437 = vmul.f32 %v1420, %v386
        %v1438 = vmul.f32 %v1421, %v387
        %v1439 = vmul.f32 %v1422, %v388
        %v1440 = vmul.f32 %v1423, %v389
        %vm1441 = vcmask 7168
        %v1442 = vsel %vm1441, %v1425, 0.0
        %v1443 = vsel %vm1441, %v1426, 0.0
        %v1444 = vadd.f32 %v1442, %v1443
        %v1445 = vsel %vm1441, %v1427, 0.0
        %v1446 = vadd.f32 %v1444, %v1445
        %v1447 = vsel %vm1441, %v1428, 0.0
        %v1448 = vadd.f32 %v1446, %v1447
        %v1449 = vsel %vm1441, %v1429, 0.0
        %v1450 = vadd.f32 %v1448, %v1449
        %v1451 = vsel %vm1441, %v1430, 0.0
        %v1452 = vadd.f32 %v1450, %v1451
        %v1453 = vsel %vm1441, %v1431, 0.0
        %v1454 = vadd.f32 %v1452, %v1453
        %v1455 = vsel %vm1441, %v1432, 0.0
        %v1456 = vadd.f32 %v1454, %v1455
        %v1457 = vsel %vm1441, %v1433, 0.0
        %v1458 = vadd.f32 %v1456, %v1457
        %v1459 = vsel %vm1441, %v1434, 0.0
        %v1460 = vadd.f32 %v1458, %v1459
        %v1461 = vsel %vm1441, %v1435, 0.0
        %v1462 = vadd.f32 %v1460, %v1461
        %v1463 = vsel %vm1441, %v1436, 0.0
        %v1464 = vadd.f32 %v1462, %v1463
        %v1465 = vsel %vm1441, %v1437, 0.0
        %v1466 = vadd.f32 %v1464, %v1465
        %v1467 = vsel %vm1441, %v1438, 0.0
        %v1468 = vadd.f32 %v1466, %v1467
        %v1469 = vsel %vm1441, %v1439, 0.0
        %v1470 = vadd.f32 %v1468, %v1469
        %v1471 = vsel %vm1441, %v1440, 0.0
        %v1472 = vadd.f32 %v1470, %v1471
        %1473 = vadd.xlane.f32.xlu0 %v1472
        %v1474 = vpop.xlane.xlu0 %1473
        %v1475 = vrot.slane %v1474, 4
        %v1476 = vadd.f32 %v1474, %v1475
        %v1477 = vrot.slane %v1476, 2
        %v1478 = vadd.f32 %v1476, %v1477
        %v1479 = vrot.slane %v1478, 1
        %v1480 = vadd.f32 %v1478, %v1479
        %s1481 = vtos %v1480
        %s1482 = smul.f32 %s1481, 0.00390625
        %s1483 = sadd.f32 %s1424, %s1482
        %s1484 = scalar_lea.smem [#allocation6], 0
        %1485 = sst [smem:[%s1484]] %s1483
        %1486 = vst.msk [vmem:[%s315] sm:$0xff] %vm1441, %v1249
        %1487 = vst.msk [vmem:[%s315 + $0x8] sm:$0xff] %vm1441, %v1251
        %1488 = vst.msk [vmem:[%s315 + $0x10] sm:$0xff] %vm1441, %v1253
        %1489 = vst.msk [vmem:[%s315 + $0x18] sm:$0xff] %vm1441, %v1255
        %1490 = vst.msk [vmem:[%s315 + $0x20] sm:$0xff] %vm1441, %v1257
        %1491 = vst.msk [vmem:[%s315 + $0x28] sm:$0xff] %vm1441, %v1259
        %1492 = vst.msk [vmem:[%s315 + $0x30] sm:$0xff] %vm1441, %v1261
        %1493 = vst.msk [vmem:[%s315 + $0x38] sm:$0xff] %vm1441, %v1263
        %1494 = vst.msk [vmem:[%s315 + $0x40] sm:$0xff] %vm1441, %v1265
        %1495 = vst.msk [vmem:[%s315 + $0x48] sm:$0xff] %vm1441, %v1267
        %1496 = vst.msk [vmem:[%s315 + $0x50] sm:$0xff] %vm1441, %v1269
        %1497 = vst.msk [vmem:[%s315 + $0x58] sm:$0xff] %vm1441, %v1271
        %1498 = vst.msk [vmem:[%s315 + $0x60] sm:$0xff] %vm1441, %v1273
        %1499 = vst.msk [vmem:[%s315 + $0x68] sm:$0xff] %vm1441, %v1275
        %1500 = vst.msk [vmem:[%s315 + $0x70] sm:$0xff] %vm1441, %v1277
        %1501 = vst.msk [vmem:[%s315 + $0x78] sm:$0xff] %vm1441, %v1279
        %1502 = vadd.xlane.f32.xlu0 %v1344
        %v1503 = vpop.xlane.xlu0 %1502
        %1504 = vadd.xlane.f32.xlu0 %v1345
        %v1505 = vpop.xlane.xlu0 %1504
        %1506 = vadd.xlane.f32.xlu0 %v1346
        %v1507 = vpop.xlane.xlu0 %1506
        %1508 = vadd.xlane.f32.xlu0 %v1347
        %v1509 = vpop.xlane.xlu0 %1508
        %1510 = vadd.xlane.f32.xlu0 %v1348
        %v1511 = vpop.xlane.xlu0 %1510
        %1512 = vadd.xlane.f32.xlu0 %v1349
        %v1513 = vpop.xlane.xlu0 %1512
        %1514 = vadd.xlane.f32.xlu0 %v1350
        %v1515 = vpop.xlane.xlu0 %1514
        %1516 = vadd.xlane.f32.xlu0 %v1351
        %v1517 = vpop.xlane.xlu0 %1516
        %1518 = vadd.xlane.f32.xlu0 %v1352
        %v1519 = vpop.xlane.xlu0 %1518
        %1520 = vadd.xlane.f32.xlu0 %v1353
        %v1521 = vpop.xlane.xlu0 %1520
        %1522 = vadd.xlane.f32.xlu0 %v1354
        %v1523 = vpop.xlane.xlu0 %1522
        %1524 = vadd.xlane.f32.xlu0 %v1355
        %v1525 = vpop.xlane.xlu0 %1524
        %1526 = vadd.xlane.f32.xlu0 %v1356
        %v1527 = vpop.xlane.xlu0 %1526
        %1528 = vadd.xlane.f32.xlu0 %v1357
        %v1529 = vpop.xlane.xlu0 %1528
        %1530 = vadd.xlane.f32.xlu0 %v1358
        %v1531 = vpop.xlane.xlu0 %1530
        %1532 = vadd.xlane.f32.xlu0 %v1359
        %v1533 = vpop.xlane.xlu0 %1532
        %v1534 = vmul.f32 %v374, 0.00390625
        %v1535 = vmul.f32 %v375, 0.00390625
        %v1536 = vmul.f32 %v376, 0.00390625
        %v1537 = vmul.f32 %v377, 0.00390625
        %v1538 = vmul.f32 %v378, 0.00390625
        %v1539 = vmul.f32 %v379, 0.00390625
        %v1540 = vmul.f32 %v380, 0.00390625
        %v1541 = vmul.f32 %v381, 0.00390625
        %v1542 = vmul.f32 %v382, 0.00390625
        %v1543 = vmul.f32 %v383, 0.00390625
        %v1544 = vmul.f32 %v384, 0.00390625
        %v1545 = vmul.f32 %v385, 0.00390625
        %v1546 = vmul.f32 %v386, 0.00390625
        %v1547 = vmul.f32 %v387, 0.00390625
        %v1548 = vmul.f32 %v388, 0.00390625
        %v1549 = vmul.f32 %v389, 0.00390625
        %v1550 = vmul.f32 %v815, %v1503
        %v1551 = vmul.f32 %v817, %v1505
        %v1552 = vmul.f32 %v819, %v1507
        %v1553 = vmul.f32 %v821, %v1509
        %v1554 = vmul.f32 %v823, %v1511
        %v1555 = vmul.f32 %v825, %v1513
        %v1556 = vmul.f32 %v827, %v1515
        %v1557 = vmul.f32 %v829, %v1517
        %v1558 = vmul.f32 %v831, %v1519
        %v1559 = vmul.f32 %v833, %v1521
        %v1560 = vmul.f32 %v835, %v1523
        %v1561 = vmul.f32 %v837, %v1525
        %v1562 = vmul.f32 %v839, %v1527
        %v1563 = vmul.f32 %v841, %v1529
        %v1564 = vmul.f32 %v843, %v1531
        %v1565 = vmul.f32 %v845, %v1533
        %v1566 = vsub.f32 %v1550, %v1344
        %v1567 = vsub.f32 %v1551, %v1345
        %v1568 = vsub.f32 %v1552, %v1346
        %v1569 = vsub.f32 %v1553, %v1347
        %v1570 = vsub.f32 %v1554, %v1348
        %v1571 = vsub.f32 %v1555, %v1349
        %v1572 = vsub.f32 %v1556, %v1350
        %v1573 = vsub.f32 %v1557, %v1351
        %v1574 = vsub.f32 %v1558, %v1352
        %v1575 = vsub.f32 %v1559, %v1353
        %v1576 = vsub.f32 %v1560, %v1354
        %v1577 = vsub.f32 %v1561, %v1355
        %v1578 = vsub.f32 %v1562, %v1356
        %v1579 = vsub.f32 %v1563, %v1357
        %v1580 = vsub.f32 %v1564, %v1358
        %v1581 = vsub.f32 %v1565, %v1359
        %1583 = vset.pattern.permute.xlu0 0
        %1584 = vperm.xlu0 %1583, %v1534
        %v1585 = vpop.permute.xlu0 %1584
        %1588 = vset.pattern.permute.xlu0 0
        %1589 = vperm.xlu0 %1588, %v1535
        %v1590 = vpop.permute.xlu0 %1589
        %1593 = vset.pattern.permute.xlu0 0
        %1594 = vperm.xlu0 %1593, %v1536
        %v1595 = vpop.permute.xlu0 %1594
        %1598 = vset.pattern.permute.xlu0 0
        %1599 = vperm.xlu0 %1598, %v1537
        %v1600 = vpop.permute.xlu0 %1599
        %1603 = vset.pattern.permute.xlu0 0
        %1604 = vperm.xlu0 %1603, %v1538
        %v1605 = vpop.permute.xlu0 %1604
        %1608 = vset.pattern.permute.xlu0 0
        %1609 = vperm.xlu0 %1608, %v1539
        %v1610 = vpop.permute.xlu0 %1609
        %1613 = vset.pattern.permute.xlu0 0
        %1614 = vperm.xlu0 %1613, %v1540
        %v1615 = vpop.permute.xlu0 %1614
        %1618 = vset.pattern.permute.xlu0 0
        %1619 = vperm.xlu0 %1618, %v1541
        %v1620 = vpop.permute.xlu0 %1619
        %1623 = vset.pattern.permute.xlu0 0
        %1624 = vperm.xlu0 %1623, %v1542
        %v1625 = vpop.permute.xlu0 %1624
        %1628 = vset.pattern.permute.xlu0 0
        %1629 = vperm.xlu0 %1628, %v1543
        %v1630 = vpop.permute.xlu0 %1629
        %1633 = vset.pattern.permute.xlu0 0
        %1634 = vperm.xlu0 %1633, %v1544
        %v1635 = vpop.permute.xlu0 %1634
        %1638 = vset.pattern.permute.xlu0 0
        %1639 = vperm.xlu0 %1638, %v1545
        %v1640 = vpop.permute.xlu0 %1639
        %1643 = vset.pattern.permute.xlu0 0
        %1644 = vperm.xlu0 %1643, %v1546
        %v1645 = vpop.permute.xlu0 %1644
        %1648 = vset.pattern.permute.xlu0 0
        %1649 = vperm.xlu0 %1648, %v1547
        %v1650 = vpop.permute.xlu0 %1649
        %1653 = vset.pattern.permute.xlu0 0
        %1654 = vperm.xlu0 %1653, %v1548
        %v1655 = vpop.permute.xlu0 %1654
        %1658 = vset.pattern.permute.xlu0 0
        %1659 = vperm.xlu0 %1658, %v1549
        %v1660 = vpop.permute.xlu0 %1659
        %v1662 = vmul.f32 %v1585, %v1566
        %v1663 = vmul.f32 %v1590, %v1567
        %v1664 = vmul.f32 %v1595, %v1568
        %v1665 = vmul.f32 %v1600, %v1569
        %v1666 = vmul.f32 %v1605, %v1570
        %v1667 = vmul.f32 %v1610, %v1571
        %v1668 = vmul.f32 %v1615, %v1572
        %v1669 = vmul.f32 %v1620, %v1573
        %v1670 = vmul.f32 %v1625, %v1574
        %v1671 = vmul.f32 %v1630, %v1575
        %v1672 = vmul.f32 %v1635, %v1576
        %v1673 = vmul.f32 %v1640, %v1577
        %v1674 = vmul.f32 %v1645, %v1578
        %v1675 = vmul.f32 %v1650, %v1579
        %v1676 = vmul.f32 %v1655, %v1580
        %v1677 = vmul.f32 %v1660, %v1581
        %1678 = vxpose.xlu0.b32.start [1/16] %v1662, 128
        %1679 = vxpose.xlu0.b32.cont [2/16] %v1663, 128
        %1680 = vxpose.xlu0.b32.cont [3/16] %v1664, 128
        %1681 = vxpose.xlu0.b32.cont [4/16] %v1665, 128
        %1682 = vxpose.xlu0.b32.cont [5/16] %v1666, 128
        %1683 = vxpose.xlu0.b32.cont [6/16] %v1667, 128
        %1684 = vxpose.xlu0.b32.cont [7/16] %v1668, 128
        %1685 = vxpose.xlu0.b32.cont [8/16] %v1669, 128
        %1686 = vxpose.xlu0.b32.cont [9/16] %v1670, 128
        %1687 = vxpose.xlu0.b32.cont [10/16] %v1671, 128
        %1688 = vxpose.xlu0.b32.cont [11/16] %v1672, 128
        %1689 = vxpose.xlu0.b32.cont [12/16] %v1673, 128
        %1690 = vxpose.xlu0.b32.cont [13/16] %v1674, 128
        %1691 = vxpose.xlu0.b32.cont [14/16] %v1675, 128
        %1692 = vxpose.xlu0.b32.cont [15/16] %v1676, 128
        %1693 = vxpose.xlu0.b32.end [16/16] %v1677, 128
        %v1694 = vpop.trf.xlu0
        %v1695 = vpop.trf.xlu0
        %v1696 = vpop.trf.xlu0
        %v1697 = vpop.trf.xlu0
        %v1698 = vpop.trf.xlu0
        %v1699 = vpop.trf.xlu0
        %v1700 = vpop.trf.xlu0
        %v1701 = vpop.trf.xlu0
        %v1702 = vpop.trf.xlu0
        %v1703 = vpop.trf.xlu0
        %v1704 = vpop.trf.xlu0
        %v1705 = vpop.trf.xlu0
        %v1706 = vpop.trf.xlu0
        %v1707 = vpop.trf.xlu0
        %v1708 = vpop.trf.xlu0
        %v1709 = vpop.trf.xlu0
        %v1710 = vpack.c.bf16 %v1695, %v1694
        %v1711 = vpack.c.bf16 %v1697, %v1696
        %v1712 = vpack.c.bf16 %v1699, %v1698
        %v1713 = vpack.c.bf16 %v1701, %v1700
        %v1714 = vpack.c.bf16 %v1703, %v1702
        %v1715 = vpack.c.bf16 %v1705, %v1704
        %v1716 = vpack.c.bf16 %v1707, %v1706
        %v1717 = vpack.c.bf16 %v1709, %v1708
        %v1718 = vld [vmem:[#allocation7] sm:$0xff]
        %v1719 = vld [vmem:[#allocation7 + $0x8] sm:$0xff]
        %v1720 = vld [vmem:[#allocation7 + $0x10] sm:$0xff]
        %v1721 = vld [vmem:[#allocation7 + $0x18] sm:$0xff]
        %v1722 = vld [vmem:[#allocation7 + $0x20] sm:$0xff]
        %v1723 = vld [vmem:[#allocation7 + $0x28] sm:$0xff]
        %v1724 = vld [vmem:[#allocation7 + $0x30] sm:$0xff]
        %v1725 = vld [vmem:[#allocation7 + $0x38] sm:$0xff]
        %v1726 = vld [vmem:[#allocation7 + $0x40] sm:$0xff]
        %v1727 = vld [vmem:[#allocation7 + $0x48] sm:$0xff]
        %v1728 = vld [vmem:[#allocation7 + $0x50] sm:$0xff]
        %v1729 = vld [vmem:[#allocation7 + $0x58] sm:$0xff]
        %v1730 = vld [vmem:[#allocation7 + $0x60] sm:$0xff]
        %v1731 = vld [vmem:[#allocation7 + $0x68] sm:$0xff]
        %v1732 = vld [vmem:[#allocation7 + $0x70] sm:$0xff]
        %v1733 = vld [vmem:[#allocation7 + $0x78] sm:$0xff]
        %v1734 = vld [vmem:[#allocation7 + $0x80] sm:$0xff]
        %v1735 = vld [vmem:[#allocation7 + $0x88] sm:$0xff]
        %v1736 = vld [vmem:[#allocation7 + $0x90] sm:$0xff]
        %v1737 = vld [vmem:[#allocation7 + $0x98] sm:$0xff]
        %v1738 = vld [vmem:[#allocation7 + $0xa0] sm:$0xff]
        %v1739 = vld [vmem:[#allocation7 + $0xa8] sm:$0xff]
        %v1740 = vld [vmem:[#allocation7 + $0xb0] sm:$0xff]
        %v1741 = vld [vmem:[#allocation7 + $0xb8] sm:$0xff]
        %v1742 = vld [vmem:[#allocation7 + $0xc0] sm:$0xff]
        %v1743 = vld [vmem:[#allocation7 + $0xc8] sm:$0xff]
        %v1744 = vld [vmem:[#allocation7 + $0xd0] sm:$0xff]
        %v1745 = vld [vmem:[#allocation7 + $0xd8] sm:$0xff]
        %v1746 = vld [vmem:[#allocation7 + $0xe0] sm:$0xff]
        %v1747 = vld [vmem:[#allocation7 + $0xe8] sm:$0xff]
        %v1748 = vld [vmem:[#allocation7 + $0xf0] sm:$0xff]
        %v1749 = vld [vmem:[#allocation7 + $0xf8] sm:$0xff]
        %1750 = vmatprep.subr.bf16.mxu0 %v478
        %1751 = vmatpush1.bf16.msra.mxu0 %v477
        %1752 = vmatprep.subr.bf16.mxu0 %v480
        %1753 = vmatpush1.bf16.msra.mxu0 %v479
        %1754 = vmatprep.subr.bf16.mxu0 %v482
        %1755 = vmatpush1.bf16.msra.mxu0 %v481
        %1756 = vmatprep.subr.bf16.mxu0 %v484
        %1757 = vmatpush1.bf16.msra.mxu0 %v483
        %1758 = vmatprep.subr.bf16.mxu0 %v486
        %1759 = vmatpush1.bf16.msra.mxu0 %v485
        %1760 = vmatprep.subr.bf16.mxu0 %v488
        %1761 = vmatpush1.bf16.msra.mxu0 %v487
        %1762 = vmatprep.subr.bf16.mxu0 %v490
        %1763 = vmatpush1.bf16.msra.mxu0 %v489
        %1764 = vmatprep.subr.bf16.mxu0 %v492
        %1765 = vmatpush1.bf16.msra.mxu0 %v491
        %1766 = vmatprep.subr.bf16.mxu0 0
        %1767 = vmatpush1.bf16.msra.mxu0 0
        %1768 = vmatprep.subr.bf16.mxu0 0
        %1769 = vmatpush1.bf16.msra.mxu0 0
        %1770 = vmatprep.subr.bf16.mxu0 0
        %1771 = vmatpush1.bf16.msra.mxu0 0
        %1772 = vmatprep.subr.bf16.mxu0 0
        %1773 = vmatpush1.bf16.msra.mxu0 0
        %1774 = vmatprep.subr.bf16.mxu0 0
        %1775 = vmatpush1.bf16.msra.mxu0 0
        %1776 = vmatprep.subr.bf16.mxu0 0
        %1777 = vmatpush1.bf16.msra.mxu0 0
        %1778 = vmatprep.subr.bf16.mxu0 0
        %1779 = vmatpush1.bf16.msra.mxu0 0
        %1780 = vmatprep.subr.bf16.mxu0 0
        %1781 = vmatpush1.bf16.msra.mxu0 0
        %1782 = vmatprep.mubr.bf16.mxu0 0
        %1783 = vmatmul.mubr.bf16.gmra.mrb[0].mxu0 %v1710
        %v1784 = vpop.f32.mrb[0].mxu0
        %v1785 = vadd.f32 0.0, %v1784
        %v1786 = vpop.f32.mrb[0].mxu0
        %v1787 = vadd.f32 0.0, %v1786
        %v1788 = vpop.f32.mrb[0].mxu0
        %v1789 = vadd.f32 0.0, %v1788
        %v1790 = vpop.f32.mrb[0].mxu0
        %v1791 = vadd.f32 0.0, %v1790
        %1792 = vmatprep.mubr.bf16.mxu0 0
        %1793 = vmatmul.mubr.bf16.gmra.mrb[0].mxu0 %v1711
        %v1794 = vpop.f32.mrb[0].mxu0
        %v1795 = vadd.f32 0.0, %v1794
        %v1796 = vpop.f32.mrb[0].mxu0
        %v1797 = vadd.f32 0.0, %v1796
        %v1798 = vpop.f32.mrb[0].mxu0
        %v1799 = vadd.f32 0.0, %v1798
        %v1800 = vpop.f32.mrb[0].mxu0
        %v1801 = vadd.f32 0.0, %v1800
        %1802 = vmatprep.mubr.bf16.mxu0 0
        %1803 = vmatmul.mubr.bf16.gmra.mrb[0].mxu0 %v1712
        %v1804 = vpop.f32.mrb[0].mxu0
        %v1805 = vadd.f32 0.0, %v1804
        %v1806 = vpop.f32.mrb[0].mxu0
        %v1807 = vadd.f32 0.0, %v1806
        %v1808 = vpop.f32.mrb[0].mxu0
        %v1809 = vadd.f32 0.0, %v1808
        %v1810 = vpop.f32.mrb[0].mxu0
        %v1811 = vadd.f32 0.0, %v1810
        %1812 = vmatprep.mubr.bf16.mxu0 0
        %1813 = vmatmul.mubr.bf16.gmra.mrb[0].mxu0 %v1713
        %v1814 = vpop.f32.mrb[0].mxu0
        %v1815 = vadd.f32 0.0, %v1814
        %v1816 = vpop.f32.mrb[0].mxu0
        %v1817 = vadd.f32 0.0, %v1816
        %v1818 = vpop.f32.mrb[0].mxu0
        %v1819 = vadd.f32 0.0, %v1818
        %v1820 = vpop.f32.mrb[0].mxu0
        %v1821 = vadd.f32 0.0, %v1820
        %1822 = vmatprep.mubr.bf16.mxu0 0
        %1823 = vmatmul.mubr.bf16.gmra.mrb[0].mxu0 %v1714
        %v1824 = vpop.f32.mrb[0].mxu0
        %v1825 = vadd.f32 0.0, %v1824
        %v1826 = vpop.f32.mrb[0].mxu0
        %v1827 = vadd.f32 0.0, %v1826
        %v1828 = vpop.f32.mrb[0].mxu0
        %v1829 = vadd.f32 0.0, %v1828
        %v1830 = vpop.f32.mrb[0].mxu0
        %v1831 = vadd.f32 0.0, %v1830
        %1832 = vmatprep.mubr.bf16.mxu0 0
        %1833 = vmatmul.mubr.bf16.gmra.mrb[0].mxu0 %v1715
        %v1834 = vpop.f32.mrb[0].mxu0
        %v1835 = vadd.f32 0.0, %v1834
        %v1836 = vpop.f32.mrb[0].mxu0
        %v1837 = vadd.f32 0.0, %v1836
        %v1838 = vpop.f32.mrb[0].mxu0
        %v1839 = vadd.f32 0.0, %v1838
        %v1840 = vpop.f32.mrb[0].mxu0
        %v1841 = vadd.f32 0.0, %v1840
        %1842 = vmatprep.mubr.bf16.mxu0 0
        %1843 = vmatmul.mubr.bf16.gmra.mrb[0].mxu0 %v1716
        %v1844 = vpop.f32.mrb[0].mxu0
        %v1845 = vadd.f32 0.0, %v1844
        %v1846 = vpop.f32.mrb[0].mxu0
        %v1847 = vadd.f32 0.0, %v1846
        %v1848 = vpop.f32.mrb[0].mxu0
        %v1849 = vadd.f32 0.0, %v1848
        %v1850 = vpop.f32.mrb[0].mxu0
        %v1851 = vadd.f32 0.0, %v1850
        %1852 = vmatprep.mubr.bf16.mxu0 0
        %1853 = vmatmul.mubr.bf16.gmra.mrb[0].mxu0 %v1717
        %v1854 = vpop.f32.mrb[0].mxu0
        %v1855 = vadd.f32 0.0, %v1854
        %v1856 = vpop.f32.mrb[0].mxu0
        %v1857 = vadd.f32 0.0, %v1856
        %v1858 = vpop.f32.mrb[0].mxu0
        %v1859 = vadd.f32 0.0, %v1858
        %v1860 = vpop.f32.mrb[0].mxu0
        %v1861 = vadd.f32 0.0, %v1860
        %1862 = vdwg.mxu0
        %v1863 = vadd.f32 %v1718, %v1785
        %v1864 = vadd.f32 %v1719, %v1787
        %v1865 = vadd.f32 %v1720, %v1789
        %v1866 = vadd.f32 %v1721, %v1791
        %v1867 = vadd.f32 %v1722, %v1795
        %v1868 = vadd.f32 %v1723, %v1797
        %v1869 = vadd.f32 %v1724, %v1799
        %v1870 = vadd.f32 %v1725, %v1801
        %v1871 = vadd.f32 %v1726, %v1805
        %v1872 = vadd.f32 %v1727, %v1807
        %v1873 = vadd.f32 %v1728, %v1809
        %v1874 = vadd.f32 %v1729, %v1811
        %v1875 = vadd.f32 %v1730, %v1815
        %v1876 = vadd.f32 %v1731, %v1817
        %v1877 = vadd.f32 %v1732, %v1819
        %v1878 = vadd.f32 %v1733, %v1821
        %v1879 = vadd.f32 %v1734, %v1825
        %v1880 = vadd.f32 %v1735, %v1827
        %v1881 = vadd.f32 %v1736, %v1829
        %v1882 = vadd.f32 %v1737, %v1831
        %v1883 = vadd.f32 %v1738, %v1835
        %v1884 = vadd.f32 %v1739, %v1837
        %v1885 = vadd.f32 %v1740, %v1839
        %v1886 = vadd.f32 %v1741, %v1841
        %v1887 = vadd.f32 %v1742, %v1845
        %v1888 = vadd.f32 %v1743, %v1847
        %v1889 = vadd.f32 %v1744, %v1849
        %v1890 = vadd.f32 %v1745, %v1851
        %v1891 = vadd.f32 %v1746, %v1855
        %v1892 = vadd.f32 %v1747, %v1857
        %v1893 = vadd.f32 %v1748, %v1859
        %v1894 = vadd.f32 %v1749, %v1861
        %1895 = vst [vmem:[#allocation7] sm:$0xff] %v1863
        %1896 = vst [vmem:[#allocation7 + $0x8] sm:$0xff] %v1864
        %1897 = vst [vmem:[#allocation7 + $0x10] sm:$0xff] %v1865
        %1898 = vst [vmem:[#allocation7 + $0x18] sm:$0xff] %v1866
        %1899 = vst [vmem:[#allocation7 + $0x20] sm:$0xff] %v1867
        %1900 = vst [vmem:[#allocation7 + $0x28] sm:$0xff] %v1868
        %1901 = vst [vmem:[#allocation7 + $0x30] sm:$0xff] %v1869
        %1902 = vst [vmem:[#allocation7 + $0x38] sm:$0xff] %v1870
        %1903 = vst [vmem:[#allocation7 + $0x40] sm:$0xff] %v1871
        %1904 = vst [vmem:[#allocation7 + $0x48] sm:$0xff] %v1872
        %1905 = vst [vmem:[#allocation7 + $0x50] sm:$0xff] %v1873
        %1906 = vst [vmem:[#allocation7 + $0x58] sm:$0xff] %v1874
        %1907 = vst [vmem:[#allocation7 + $0x60] sm:$0xff] %v1875
        %1908 = vst [vmem:[#allocation7 + $0x68] sm:$0xff] %v1876
        %1909 = vst [vmem:[#allocation7 + $0x70] sm:$0xff] %v1877
        %1910 = vst [vmem:[#allocation7 + $0x78] sm:$0xff] %v1878
        %1911 = vst [vmem:[#allocation7 + $0x80] sm:$0xff] %v1879
        %1912 = vst [vmem:[#allocation7 + $0x88] sm:$0xff] %v1880
        %1913 = vst [vmem:[#allocation7 + $0x90] sm:$0xff] %v1881
        %1914 = vst [vmem:[#allocation7 + $0x98] sm:$0xff] %v1882
        %1915 = vst [vmem:[#allocation7 + $0xa0] sm:$0xff] %v1883
        %1916 = vst [vmem:[#allocation7 + $0xa8] sm:$0xff] %v1884
        %1917 = vst [vmem:[#allocation7 + $0xb0] sm:$0xff] %v1885
        %1918 = vst [vmem:[#allocation7 + $0xb8] sm:$0xff] %v1886
        %1919 = vst [vmem:[#allocation7 + $0xc0] sm:$0xff] %v1887
        %1920 = vst [vmem:[#allocation7 + $0xc8] sm:$0xff] %v1888
        %1921 = vst [vmem:[#allocation7 + $0xd0] sm:$0xff] %v1889
        %1922 = vst [vmem:[#allocation7 + $0xd8] sm:$0xff] %v1890
        %1923 = vst [vmem:[#allocation7 + $0xe0] sm:$0xff] %v1891
        %1924 = vst [vmem:[#allocation7 + $0xe8] sm:$0xff] %v1892
        %1925 = vst [vmem:[#allocation7 + $0xf0] sm:$0xff] %v1893
        %1926 = vst [vmem:[#allocation7 + $0xf8] sm:$0xff] %v1894
        %v1927 = vld [vmem:[#allocation8] sm:$0x1]
        %v1928 = vpack.c.bf16 %v1663, %v1662
        %v1929 = vpack.c.bf16 %v1665, %v1664
        %v1930 = vpack.c.bf16 %v1667, %v1666
        %v1931 = vpack.c.bf16 %v1669, %v1668
        %v1932 = vpack.c.bf16 %v1671, %v1670
        %v1933 = vpack.c.bf16 %v1673, %v1672
        %v1934 = vpack.c.bf16 %v1675, %v1674
        %v1935 = vpack.c.bf16 %v1677, %v1676
        %1936 = vmatprep.subr.bf16.mxu0 0
        %1937 = vmatpush1.bf16.msra.mxu0 %v1928
        %1938 = vmatprep.subr.bf16.mxu0 0
        %1939 = vmatpush1.bf16.msra.mxu0 %v1929
        %1940 = vmatprep.subr.bf16.mxu0 0
        %1941 = vmatpush1.bf16.msra.mxu0 %v1930
        %1942 = vmatprep.subr.bf16.mxu0 0
        %1943 = vmatpush1.bf16.msra.mxu0 %v1931
        %1944 = vmatprep.subr.bf16.mxu0 0
        %1945 = vmatpush1.bf16.msra.mxu0 %v1932
        %1946 = vmatprep.subr.bf16.mxu0 0
        %1947 = vmatpush1.bf16.msra.mxu0 %v1933
        %1948 = vmatprep.subr.bf16.mxu0 0
        %1949 = vmatpush1.bf16.msra.mxu0 %v1934
        %1950 = vmatprep.subr.bf16.mxu0 0
        %1951 = vmatpush1.bf16.msra.mxu0 %v1935
        %1952 = vmatprep.subr.bf16.mxu0 0
        %1953 = vmatpush1.bf16.msra.mxu0 0
        %1954 = vmatprep.subr.bf16.mxu0 0
        %1955 = vmatpush1.bf16.msra.mxu0 0
        %1956 = vmatprep.subr.bf16.mxu0 0
        %1957 = vmatpush1.bf16.msra.mxu0 0
        %1958 = vmatprep.subr.bf16.mxu0 0
        %1959 = vmatpush1.bf16.msra.mxu0 0
        %1960 = vmatprep.subr.bf16.mxu0 0
        %1961 = vmatpush1.bf16.msra.mxu0 0
        %1962 = vmatprep.subr.bf16.mxu0 0
        %1963 = vmatpush1.bf16.msra.mxu0 0
        %1964 = vmatprep.subr.bf16.mxu0 0
        %1965 = vmatpush1.bf16.msra.mxu0 0
        %1966 = vmatprep.subr.bf16.mxu0 0
        %1967 = vmatpush1.bf16.msra.mxu0 0
        %1968 = vmatprep.mubr.bf16.mxu0 0
        %1969 = vmatmul.mubr.bf16.gmra.mrb[0].mxu0 1065369472
        %v1970 = vpop.f32.mrb[0].mxu0
        %v1971 = vadd.f32 0.0, %v1970
        %v1972 = vpop.f32.mrb[0].mxu0
        %v1973 = vpop.f32.mrb[0].mxu0
        %v1974 = vpop.f32.mrb[0].mxu0
        %1975 = vdwg.mxu0
        %v1976 = vadd.f32 %v1927, %v1971
        %1977 = vst [vmem:[#allocation8] sm:$0x1] %v1976
        %s1978 = smul.u32 16, %s23
        %p1979 = scmp.lt.s32.totalorder %s1978, 31
        %s1980 = scalar_select %p1979, %s1978, 31
        %s1981 = smul.addr %s1980, 8
        %s1982 = scalar_lea.vmem %s5, %s1981
        // Predicated region
        $region45: #{tpu_custom_call.1} parent=35 // pred_check
          %p1983 = pneg %p130
        $region46: #{tpu_custom_call.1} parent=35 // pred_check_branch
          %1985 = sbr.rel (%p1983) target = $region48
        $region47: #{tpu_custom_call.1} parent=35 // pred_region
          %s1987 = ssub.s32 16, 16
          %1988 = vsyncadd [#allocation5], %s1987
          %1991 = dma.smem_to_hbm [#allocation6], 16, %s4, [#allocation5]
        $region48: #{tpu_custom_call.1} parent=35 // pred_fallthru
          _
        // Predicated region
        $region49: #{tpu_custom_call.1} parent=35 // pred_check
          %p1992 = pneg %p156
        $region50: #{tpu_custom_call.1} parent=35 // pred_check_branch
          %1994 = sbr.rel (%p1992) target = $region52
        $region51: #{tpu_custom_call.1} parent=35 // pred_region
          %s1995 = smul.u32 16, %s23
        $region52: #{tpu_custom_call.1} parent=35 // pred_fallthru
          _
        // Predicated region
        $region53: #{tpu_custom_call.1} parent=35 // pred_check
          %p1996 = pneg %p177
        $region54: #{tpu_custom_call.1} parent=35 // pred_check_branch
          %1998 = sbr.rel (%p1996) target = $region56
        $region55: #{tpu_custom_call.1} parent=35 // pred_region
          %s2000 = ssub.s32 4096, 4096
          %2001 = vsyncadd [#allocation4], %s2000
          %s2002 = sshll.u32 [#allocation7], 4
          %s2003 = int_to_ptr.vmem [resolvable:$true] %s2002
          %2008 = dma.vmem_to_hbm [thread:$0]  %s2003, 4096, %s6, [#allocation4], 256, 256, 16
        $region56: #{tpu_custom_call.1} parent=35 // pred_fallthru
          _
        // Predicated region
        $region57: #{tpu_custom_call.1} parent=35 // pred_check
          %p2009 = pneg %p198
        $region58: #{tpu_custom_call.1} parent=35 // pred_check_branch
          %2011 = sbr.rel (%p2009) target = $region60
        $region59: #{tpu_custom_call.1} parent=35 // pred_region
          %s2013 = ssub.s32 16, 16
          %2014 = vsyncadd [#allocation9], %s2013
          %s2016 = sshll.u32 [#allocation8], 4
          %s2017 = int_to_ptr.vmem [resolvable:$true] %s2016
          %2019 = dma.vmem_to_hbm [thread:$0]  %s2017, 16, %s7, [#allocation9]
        $region60: #{tpu_custom_call.1} parent=35 // pred_fallthru
          _
        // Predicated region
        $region61: #{tpu_custom_call.1} parent=35 // pred_check
          %p2020 = pneg %p130
        $region62: #{tpu_custom_call.1} parent=35 // pred_check_branch
          %2022 = sbr.rel (%p2020) target = $region64
        $region63: #{tpu_custom_call.1} parent=35 // pred_region
          %2023 = dma.done [#allocation5], 16
        $region64: #{tpu_custom_call.1} parent=35 // pred_fallthru
          _
        // Predicated region
        $region65: #{tpu_custom_call.1} parent=35 // pred_check
          %p2024 = pneg %p177
        $region66: #{tpu_custom_call.1} parent=35 // pred_check_branch
          %2026 = sbr.rel (%p2024) target = $region68
        $region67: #{tpu_custom_call.1} parent=35 // pred_region
          %2027 = dma.done [#allocation4], 4096
        $region68: #{tpu_custom_call.1} parent=35 // pred_fallthru
          _
        // Predicated region
        $region69: #{tpu_custom_call.1} parent=35 // pred_check
          %p2028 = pneg %p198
        $region70: #{tpu_custom_call.1} parent=35 // pred_check_branch
          %2030 = sbr.rel (%p2028) target = $region72
        $region71: #{tpu_custom_call.1} parent=35 // pred_region
          %2031 = dma.done [#allocation9], 16
        $region72: #{tpu_custom_call.1} parent=35 // pred_fallthru
          _
        %2032 = sfence
      $region36: #{tpu_custom_call.1} parent=5 // pred_fallthru
        _
      %p2033 = scmp.le.s32.totalorder 2, %s18
      // Predicated region
      $region73: #{tpu_custom_call.1} parent=5 // pred_check
        %p2034 = pneg %p2033
      $region74: #{tpu_custom_call.1} parent=5 // pred_check_branch
        %2036 = sbr.rel (%p2034) target = $region76
      $region75: #{tpu_custom_call.1} parent=5 // pred_region
        %s2037 = ssub.s32 %s18, 2
        // Predicated region
        $region77: #{tpu_custom_call.1} parent=75 // pred_check
          %p2038 = pneg %p162
        $region78: #{tpu_custom_call.1} parent=75 // pred_check_branch
          %2040 = sbr.rel (%p2038) target = $region80
        $region79: #{tpu_custom_call.1} parent=75 // pred_region
          %s2041 = smul.u32 16, %s24
          %p2042 = scmp.lt.s32.totalorder %s2041, 31
          %s2043 = scalar_select %p2042, %s2041, 31
          %s2044 = smul.addr %s2043, 8
          %s2045 = scalar_lea.vmem %s5, %s2044
        $region80: #{tpu_custom_call.1} parent=75 // pred_fallthru
          _
      $region76: #{tpu_custom_call.1} parent=5 // pred_fallthru
        _
    $region6: #{tpu_custom_call.1} parent=1 // loop_footer
      %s22 = sadd.s32 1, %s18
    $region7: #{tpu_custom_call.1} parent=1 // loop_footer_branch
      %17 = sbr.rel target = $region3
    $region8: #{tpu_custom_call.1} parent=1 // loop_exit
      _
    %2046 = vsyncpa [#allocation3], 1
    %s2047 = scalar_lea.sflag [#allocation3], 1
    %2048 = vsyncpa %s2047, 1
    %2049 = vsyncpa [#allocation4], 1
    %s2050 = scalar_lea.sflag [#allocation4], 1
    %2051 = vsyncpa %s2050, 1
    %2052 = vsyncpa [#allocation9], 1
    %2053 = vsyncpa [#allocation5], 1
    %s2054 = scalar_lea.sflag [#allocation5], 1
    %2055 = vsyncpa %s2054, 1

</llo_original>
